<compile_context>
chip_gen: v6e
topology: v6e:2x2x1
jax: 0.10.0
libtpu: 0.0.40
codegen_flags: <defaults>
</compile_context>

<pallas_src>
import functools

import jax
import jax.numpy as jnp
from jax.experimental import pallas as pl
from jax.experimental.pallas import tpu as pltpu


# ----------------------------- Pallas kernel --------------------------------
def _conv3x3_kernel(x_ref, w_ref, b_ref, o_ref, *, H, W, KH, KW):
    """3x3 stride-1 'same' conv for one image, fused patch construction.

    x_ref: (Cin, L)         zero-padded image, rows flattened with padded width Wp
    w_ref: (KH*KW, Cout, Cin)  one (Cout, Cin) weight slice per conv tap
    b_ref: (Cout, 1)        bias (f32)
    o_ref: (Cout, H*Wp)     'wide' NCHW-flat output; cols W..Wp-1 of each row are
                            junk and dropped in the wrapper (keeps lane dim dense
                            and avoids any in-kernel reshape).
    """
    Wp = W + (KW - 1)          # padded width
    M = H * Wp                 # wide output columns
    cout = o_ref.shape[0]

    acc = jnp.zeros((cout, M), jnp.float32)
    for dh in range(KH):
        for dw in range(KW):
            shift = dh * Wp + dw                       # static flat offset of this tap
            xs = x_ref[:, shift:shift + M]             # (Cin, M) shifted view (VMEM, no HBM traffic)
            wk = w_ref[dh * KW + dw]                   # (Cout, Cin)
            acc = acc + jnp.dot(wk, xs, preferred_element_type=jnp.float32)

    o_ref[...] = (acc + b_ref[...]).astype(o_ref.dtype)


def _conv3x3_same_nchw(x, weight, bias, *, compute_dtype=jnp.float32):
    """nn.Conv2d(Cin, Cout, 3, stride=1, padding=1, bias=True) in NCHW via Pallas."""
    N, Cin, H, W = x.shape
    Cout, Cin_w, KH, KW = weight.shape
    assert Cin == Cin_w and KH == 3 and KW == 3
    Wp = W + 2

    # Zero-pad: 1 row top, 2 rows bottom (the extra row keeps the largest shifted
    # flat read in range), 1 col left/right.  Flatten (rows, cols) so that every
    # conv tap (dh, dw) becomes a *static* lane-offset slice inside the kernel.
    xpad = jnp.pad(x, ((0, 0), (0, 0), (1, 2), (1, 1)))       # (N, Cin, H+3, Wp)
    L = (H + 3) * Wp
    xflat = xpad.reshape(N, Cin, L).astype(compute_dtype)     # (N, Cin, L)

    # weight (Cout, Cin, KH, KW) -> (KH*KW, Cout, Cin): one (Cout, Cin) slice per tap.
    wtaps = jnp.transpose(weight, (2, 3, 0, 1)).reshape(KH * KW, Cout, Cin)
    wtaps = wtaps.astype(compute_dtype)
    b2 = bias.reshape(Cout, 1).astype(jnp.float32)

    kernel = functools.partial(_conv3x3_kernel, H=H, W=W, KH=KH, KW=KW)
    out_wide = pl.pallas_call(
        kernel,
        out_shape=jax.ShapeDtypeStruct((N, Cout, H * Wp), jnp.float32),
        grid=(N,),                                            # one block per image
        in_specs=[
            pl.BlockSpec((None, Cin, L), lambda n: (n, 0, 0)),        # padded image
            pl.BlockSpec((KH * KW, Cout, Cin), lambda n: (0, 0, 0)),  # constant weights
            pl.BlockSpec((Cout, 1), lambda n: (0, 0)),                # constant bias
        ],
        out_specs=pl.BlockSpec((None, Cout, H * Wp), lambda n: (n, 0, 0)),  # lane-dense
        compiler_params=pltpu.CompilerParams(
            dimension_semantics=("parallel",),   # both v7x TensorCores get an image
        ),
    )(xflat, wtaps, b2)

    # Drop the 2 junk columns per row; result is already NCHW (no transpose needed).
    return out_wide.reshape(N, Cout, H, Wp)[:, :, :, :W]


# ------------------------------ Model wrapper --------------------------------
class SingleLayerModelPallas:
    """SingleLayerModel with layer_object = Conv2d(4->8, k=3, s=1, p=1)."""

    def __init__(self, key, cin=4, cout=8, kh=3, kw=3, compute_dtype=jnp.float32):
        w_key, b_key = jax.random.split(key)
        fan_in = cin * kh * kw
        bound = 1.0 / jnp.sqrt(fan_in)
        # PyTorch conv weight layout: (Cout, Cin, KH, KW)
        self.weight = jax.random.uniform(
            w_key, (cout, cin, kh, kw), jnp.float32, -bound, bound
        )
        self.bias = jax.random.uniform(b_key, (cout,), jnp.float32, -bound, bound)
        self.cin, self.cout, self.kh, self.kw = cin, cout, kh, kw
        # bfloat16 here halves kernel input DMA bytes on v6e/v7x (accumulation
        # stays f32 in the kernel); keep f32 on v5e / for bit-tight accuracy.
        self.compute_dtype = compute_dtype
        self.reshape_dim = None  # TODO(synk): reshape_dim (resize + expand) branch is not exercised by this instance.

    @functools.partial(jax.jit, static_argnums=0)
    def forward(self, x_nchw):
        return _conv3x3_same_nchw(
            x_nchw, self.weight, self.bias, compute_dtype=self.compute_dtype
        )


# ---------------------------------- main -------------------------------------
if __name__ == "__main__":
    key = jax.random.PRNGKey(0)
    mkey, xkey = jax.random.split(key)

    model = SingleLayerModelPallas(mkey)

    N, C, H, W = 2, 4, 16, 16
    x = jax.random.normal(xkey, (N, C, H, W), jnp.float32)

    y = jax.block_until_ready(model.forward(x))

    # Cross-check against XLA's conv (same semantics as nn.Conv2d, NCHW).
    y_ref = jax.lax.conv_general_dilated(
        x, model.weight, window_strides=(1, 1), padding=((1, 1), (1, 1)),
        dimension_numbers=("NCHW", "OIHW", "NCHW"),
    ) + model.bias.reshape(1, -1, 1, 1)

    assert y.shape == (N, 8, H, W)
    assert jnp.allclose(y, y_ref, atol=1e-4, rtol=1e-4), float(
        jnp.max(jnp.abs(y - y_ref))
    )

    print("KERNEL_OK")
</pallas_src>

<mosaic_0001>
module attributes {stable_mosaic.version = 11 : i64} {
  func.func @_conv3x3_kernel(%arg0: i32, %arg1: memref<1x4x342xf32, #tpu.memory_space<vmem>>, %arg2: memref<9x8x4xf32, #tpu.memory_space<vmem>>, %arg3: memref<8x1xf32, #tpu.memory_space<vmem>>, %arg4: memref<1x8x288xf32, #tpu.memory_space<vmem>>) attributes {dimension_semantics = [#tpu.dimension_semantics<parallel>], iteration_bounds = array<i64: 2>, scalar_prefetch = 0 : i64, scratch_operands = 0 : i64, tpu.core_type = #tpu.core_type<tc>, window_params = [{transform_indices = @transform_0, window_bounds = array<i64: 1, 4, 342>}, {pipeline_mode = #tpu.pipeline_mode<synchronous>, transform_indices = @transform_1, window_bounds = array<i64: 9, 8, 4>}, {pipeline_mode = #tpu.pipeline_mode<synchronous>, transform_indices = @transform_2, window_bounds = array<i64: 8, 1>}, {transform_indices = @transform_3, window_bounds = array<i64: 1, 8, 288>}]} {
    %cst = arith.constant 0.000000e+00 : f32
    %0 = vector.broadcast %cst : f32 to vector<8x288xf32>
    %c0 = arith.constant 0 : index
    %c0_0 = arith.constant 0 : index
    %c0_1 = arith.constant 0 : index
    %1 = vector.load %arg1[%c0, %c0_0, %c0_1] : memref<1x4x342xf32, #tpu.memory_space<vmem>>, vector<1x4x288xf32>
    %2 = vector.shape_cast %1 : vector<1x4x288xf32> to vector<4x288xf32>
    %c0_2 = arith.constant 0 : index
    %c0_3 = arith.constant 0 : index
    %c0_4 = arith.constant 0 : index
    %3 = vector.load %arg2[%c0_2, %c0_3, %c0_4] : memref<9x8x4xf32, #tpu.memory_space<vmem>>, vector<1x8x4xf32>
    %4 = vector.shape_cast %3 : vector<1x8x4xf32> to vector<8x4xf32>
    %cst_5 = arith.constant dense<0.000000e+00> : vector<8x288xf32>
    %5 = tpu.matmul %4, %2, %cst_5 {dimension_numbers = #tpu.dot_dimension_numbers<[1], [0], [0], [1], [0, 0, 1, 1], [], []>} : vector<8x4xf32>, vector<4x288xf32>, vector<8x288xf32> -> vector<8x288xf32>
    %6 = arith.addf %0, %5 : vector<8x288xf32>
    %c0_6 = arith.constant 0 : index
    %c0_7 = arith.constant 0 : index
    %c1 = arith.constant 1 : index
    %7 = vector.load %arg1[%c0_6, %c0_7, %c1] : memref<1x4x342xf32, #tpu.memory_space<vmem>>, vector<1x4x288xf32>
    %8 = vector.shape_cast %7 : vector<1x4x288xf32> to vector<4x288xf32>
    %c1_8 = arith.constant 1 : index
    %c0_9 = arith.constant 0 : index
    %c0_10 = arith.constant 0 : index
    %9 = vector.load %arg2[%c1_8, %c0_9, %c0_10] : memref<9x8x4xf32, #tpu.memory_space<vmem>>, vector<1x8x4xf32>
    %10 = vector.shape_cast %9 : vector<1x8x4xf32> to vector<8x4xf32>
    %cst_11 = arith.constant dense<0.000000e+00> : vector<8x288xf32>
    %11 = tpu.matmul %10, %8, %cst_11 {dimension_numbers = #tpu.dot_dimension_numbers<[1], [0], [0], [1], [0, 0, 1, 1], [], []>} : vector<8x4xf32>, vector<4x288xf32>, vector<8x288xf32> -> vector<8x288xf32>
    %12 = arith.addf %6, %11 : vector<8x288xf32>
    %c0_12 = arith.constant 0 : index
    %c0_13 = arith.constant 0 : index
    %c2 = arith.constant 2 : index
    %13 = vector.load %arg1[%c0_12, %c0_13, %c2] : memref<1x4x342xf32, #tpu.memory_space<vmem>>, vector<1x4x288xf32>
    %14 = vector.shape_cast %13 : vector<1x4x288xf32> to vector<4x288xf32>
    %c2_14 = arith.constant 2 : index
    %c0_15 = arith.constant 0 : index
    %c0_16 = arith.constant 0 : index
    %15 = vector.load %arg2[%c2_14, %c0_15, %c0_16] : memref<9x8x4xf32, #tpu.memory_space<vmem>>, vector<1x8x4xf32>
    %16 = vector.shape_cast %15 : vector<1x8x4xf32> to vector<8x4xf32>
    %cst_17 = arith.constant dense<0.000000e+00> : vector<8x288xf32>
    %17 = tpu.matmul %16, %14, %cst_17 {dimension_numbers = #tpu.dot_dimension_numbers<[1], [0], [0], [1], [0, 0, 1, 1], [], []>} : vector<8x4xf32>, vector<4x288xf32>, vector<8x288xf32> -> vector<8x288xf32>
    %18 = arith.addf %12, %17 : vector<8x288xf32>
    %c0_18 = arith.constant 0 : index
    %c0_19 = arith.constant 0 : index
    %c18 = arith.constant 18 : index
    %19 = vector.load %arg1[%c0_18, %c0_19, %c18] : memref<1x4x342xf32, #tpu.memory_space<vmem>>, vector<1x4x288xf32>
    %20 = vector.shape_cast %19 : vector<1x4x288xf32> to vector<4x288xf32>
    %c3 = arith.constant 3 : index
    %c0_20 = arith.constant 0 : index
    %c0_21 = arith.constant 0 : index
    %21 = vector.load %arg2[%c3, %c0_20, %c0_21] : memref<9x8x4xf32, #tpu.memory_space<vmem>>, vector<1x8x4xf32>
    %22 = vector.shape_cast %21 : vector<1x8x4xf32> to vector<8x4xf32>
    %cst_22 = arith.constant dense<0.000000e+00> : vector<8x288xf32>
    %23 = tpu.matmul %22, %20, %cst_22 {dimension_numbers = #tpu.dot_dimension_numbers<[1], [0], [0], [1], [0, 0, 1, 1], [], []>} : vector<8x4xf32>, vector<4x288xf32>, vector<8x288xf32> -> vector<8x288xf32>
    %24 = arith.addf %18, %23 : vector<8x288xf32>
    %c0_23 = arith.constant 0 : index
    %c0_24 = arith.constant 0 : index
    %c19 = arith.constant 19 : index
    %25 = vector.load %arg1[%c0_23, %c0_24, %c19] : memref<1x4x342xf32, #tpu.memory_space<vmem>>, vector<1x4x288xf32>
    %26 = vector.shape_cast %25 : vector<1x4x288xf32> to vector<4x288xf32>
    %c4 = arith.constant 4 : index
    %c0_25 = arith.constant 0 : index
    %c0_26 = arith.constant 0 : index
    %27 = vector.load %arg2[%c4, %c0_25, %c0_26] : memref<9x8x4xf32, #tpu.memory_space<vmem>>, vector<1x8x4xf32>
    %28 = vector.shape_cast %27 : vector<1x8x4xf32> to vector<8x4xf32>
    %cst_27 = arith.constant dense<0.000000e+00> : vector<8x288xf32>
    %29 = tpu.matmul %28, %26, %cst_27 {dimension_numbers = #tpu.dot_dimension_numbers<[1], [0], [0], [1], [0, 0, 1, 1], [], []>} : vector<8x4xf32>, vector<4x288xf32>, vector<8x288xf32> -> vector<8x288xf32>
    %30 = arith.addf %24, %29 : vector<8x288xf32>
    %c0_28 = arith.constant 0 : index
    %c0_29 = arith.constant 0 : index
    %c20 = arith.constant 20 : index
    %31 = vector.load %arg1[%c0_28, %c0_29, %c20] : memref<1x4x342xf32, #tpu.memory_space<vmem>>, vector<1x4x288xf32>
    %32 = vector.shape_cast %31 : vector<1x4x288xf32> to vector<4x288xf32>
    %c5 = arith.constant 5 : index
    %c0_30 = arith.constant 0 : index
    %c0_31 = arith.constant 0 : index
    %33 = vector.load %arg2[%c5, %c0_30, %c0_31] : memref<9x8x4xf32, #tpu.memory_space<vmem>>, vector<1x8x4xf32>
    %34 = vector.shape_cast %33 : vector<1x8x4xf32> to vector<8x4xf32>
    %cst_32 = arith.constant dense<0.000000e+00> : vector<8x288xf32>
    %35 = tpu.matmul %34, %32, %cst_32 {dimension_numbers = #tpu.dot_dimension_numbers<[1], [0], [0], [1], [0, 0, 1, 1], [], []>} : vector<8x4xf32>, vector<4x288xf32>, vector<8x288xf32> -> vector<8x288xf32>
    %36 = arith.addf %30, %35 : vector<8x288xf32>
    %c0_33 = arith.constant 0 : index
    %c0_34 = arith.constant 0 : index
    %c36 = arith.constant 36 : index
    %37 = vector.load %arg1[%c0_33, %c0_34, %c36] : memref<1x4x342xf32, #tpu.memory_space<vmem>>, vector<1x4x288xf32>
    %38 = vector.shape_cast %37 : vector<1x4x288xf32> to vector<4x288xf32>
    %c6 = arith.constant 6 : index
    %c0_35 = arith.constant 0 : index
    %c0_36 = arith.constant 0 : index
    %39 = vector.load %arg2[%c6, %c0_35, %c0_36] : memref<9x8x4xf32, #tpu.memory_space<vmem>>, vector<1x8x4xf32>
    %40 = vector.shape_cast %39 : vector<1x8x4xf32> to vector<8x4xf32>
    %cst_37 = arith.constant dense<0.000000e+00> : vector<8x288xf32>
    %41 = tpu.matmul %40, %38, %cst_37 {dimension_numbers = #tpu.dot_dimension_numbers<[1], [0], [0], [1], [0, 0, 1, 1], [], []>} : vector<8x4xf32>, vector<4x288xf32>, vector<8x288xf32> -> vector<8x288xf32>
    %42 = arith.addf %36, %41 : vector<8x288xf32>
    %c0_38 = arith.constant 0 : index
    %c0_39 = arith.constant 0 : index
    %c37 = arith.constant 37 : index
    %43 = vector.load %arg1[%c0_38, %c0_39, %c37] : memref<1x4x342xf32, #tpu.memory_space<vmem>>, vector<1x4x288xf32>
    %44 = vector.shape_cast %43 : vector<1x4x288xf32> to vector<4x288xf32>
    %c7 = arith.constant 7 : index
    %c0_40 = arith.constant 0 : index
    %c0_41 = arith.constant 0 : index
    %45 = vector.load %arg2[%c7, %c0_40, %c0_41] : memref<9x8x4xf32, #tpu.memory_space<vmem>>, vector<1x8x4xf32>
    %46 = vector.shape_cast %45 : vector<1x8x4xf32> to vector<8x4xf32>
    %cst_42 = arith.constant dense<0.000000e+00> : vector<8x288xf32>
    %47 = tpu.matmul %46, %44, %cst_42 {dimension_numbers = #tpu.dot_dimension_numbers<[1], [0], [0], [1], [0, 0, 1, 1], [], []>} : vector<8x4xf32>, vector<4x288xf32>, vector<8x288xf32> -> vector<8x288xf32>
    %48 = arith.addf %42, %47 : vector<8x288xf32>
    %c0_43 = arith.constant 0 : index
    %c0_44 = arith.constant 0 : index
    %c38 = arith.constant 38 : index
    %49 = vector.load %arg1[%c0_43, %c0_44, %c38] : memref<1x4x342xf32, #tpu.memory_space<vmem>>, vector<1x4x288xf32>
    %50 = vector.shape_cast %49 : vector<1x4x288xf32> to vector<4x288xf32>
    %c8 = arith.constant 8 : index
    %c0_45 = arith.constant 0 : index
    %c0_46 = arith.constant 0 : index
    %51 = vector.load %arg2[%c8, %c0_45, %c0_46] : memref<9x8x4xf32, #tpu.memory_space<vmem>>, vector<1x8x4xf32>
    %52 = vector.shape_cast %51 : vector<1x8x4xf32> to vector<8x4xf32>
    %cst_47 = arith.constant dense<0.000000e+00> : vector<8x288xf32>
    %53 = tpu.matmul %52, %50, %cst_47 {dimension_numbers = #tpu.dot_dimension_numbers<[1], [0], [0], [1], [0, 0, 1, 1], [], []>} : vector<8x4xf32>, vector<4x288xf32>, vector<8x288xf32> -> vector<8x288xf32>
    %54 = arith.addf %48, %53 : vector<8x288xf32>
    %c0_48 = arith.constant 0 : index
    %c0_49 = arith.constant 0 : index
    %55 = vector.load %arg3[%c0_48, %c0_49] : memref<8x1xf32, #tpu.memory_space<vmem>>, vector<8x1xf32>
    %56 = vector.broadcast %55 : vector<8x1xf32> to vector<8x288xf32>
    %57 = arith.addf %54, %56 : vector<8x288xf32>
    %c0_50 = arith.constant 0 : index
    %c0_51 = arith.constant 0 : index
    %c0_52 = arith.constant 0 : index
    %58 = vector.load %arg4[%c0_50, %c0_51, %c0_52] : memref<1x8x288xf32, #tpu.memory_space<vmem>>, vector<1x8x288xf32>
    %59 = vector.shape_cast %58 : vector<1x8x288xf32> to vector<8x288xf32>
    %60 = vector.shape_cast %57 : vector<8x288xf32> to vector<1x8x288xf32>
    tpu.vector_store %arg4[%c0_50, %c0_51, %c0_52], %60 {strides = array<i32>} : memref<1x8x288xf32, #tpu.memory_space<vmem>>, vector<1x8x288xf32>,
    return
  }
  func.func @transform_0(%arg0: i32) -> (i32, i32, i32) {
    %c0_i32 = arith.constant 0 : i32
    %c0_i32_0 = arith.constant 0 : i32
    %c0_i32_1 = arith.constant 0 : i32
    return %arg0, %c0_i32, %c0_i32_0 : i32, i32, i32
  }
  func.func @transform_1(%arg0: i32) -> (i32, i32, i32) {
    %c0_i32 = arith.constant 0 : i32
    %c0_i32_0 = arith.constant 0 : i32
    %c0_i32_1 = arith.constant 0 : i32
    %c0_i32_2 = arith.constant 0 : i32
    return %c0_i32, %c0_i32_0, %c0_i32_1 : i32, i32, i32
  }
  func.func @transform_2(%arg0: i32) -> (i32, i32) {
    %c0_i32 = arith.constant 0 : i32
    %c0_i32_0 = arith.constant 0 : i32
    %c0_i32_1 = arith.constant 0 : i32
    return %c0_i32, %c0_i32_0 : i32, i32
  }
  func.func @transform_3(%arg0: i32) -> (i32, i32, i32) {
    %c0_i32 = arith.constant 0 : i32
    %c0_i32_0 = arith.constant 0 : i32
    %c0_i32_1 = arith.constant 0 : i32
    return %arg0, %c0_i32, %c0_i32_0 : i32, i32, i32
  }
}

</mosaic_0001>

<llo_original>
// kernel: forward.1
$region0: #{forward.1}
  #allocation0 [shape = 'u32[]', space=smem, size = 0x4, offset = 0x4, fixed_abs, tag = 'smem constant byte address 0x4 - core index']
  #allocation1 [shape = 'u32[144,128]{1,0:T(1,128)}', space=vmem, size = 0x12000, scoped, tag = 'internal scratch']
  %s0 = inlined_call_operand.vmem [shape: f32[2,4,342], index: 0, kind: input, shape index: {}]
  %s1 = inlined_call_operand.vmem [shape: f32[9,8,4], index: 1, kind: input, shape index: {}]
  %s2 = inlined_call_operand.vmem [shape: f32[8,1], index: 2, kind: input, shape index: {}]
  %s3 = inlined_call_operand.vmem [shape: f32[2,8,288], index: 3, kind: output, shape index: {}]
  %s4 = sld [smem:[#allocation0]]
  $region45: #{forward.1} parent=0
    _
  %s6 = ssub.s32 1, %s4
  %s7 = scalar_select 0, %s6, %s4
  loop: start=0, step=1, limit=4
  $region2: #{forward.1} parent=0 // loop_pre_header
    _
  $region3: #{forward.1} parent=0 // loop_header
    %s9 = sphi 0, %s13
    %p10 = scmp.ge.s32.totalorder %s9, 4
    %s19 = sphi 0, %s21
    %s22 = sphi 0, %s19
    %s23 = sphi 0, %s22
    %s39 = sphi 0, %s23
    %s43 = sphi 0, %s43
    %s45 = sphi 0, %s43
    %s46 = sphi 0, %s45
    %s60 = sphi 0, %s46
    %s64 = sphi 0, %s64
    %s66 = sphi 0, %s64
    %s67 = sphi 0, %s66
    %s81 = sphi 0, %s67
    %s87 = sphi 0, %s89
    %s90 = sphi 0, %s87
    %s91 = sphi 0, %s90
    %s107 = sphi 0, %s91
  $region4: #{forward.1} parent=0 // loop_header_branch
    %12 = sbr.rel (%p10) target = $region8
  $region5: #{forward.1} parent=0 // loop_body
    %s14 = ssub.s32 %s9, 1
    %s15 = ssub.s32 %s9, 2
    %s16 = sadd.s32 %s9, 1
    %s17 = ssub.s32 %s9, %s16
    %p18 = scmp.eq.s32.totalorder %s17, 0
    %s20 = sadd.s32 %s19, 1
    %s21 = scalar_select %p18, %s19, %s20
    %p24 = pneg %p18
    %p25 = scmp.eq.s32.totalorder %s9, 1
    %p26 = por %p24, %p25
    %p27 = scmp.ne.s32.totalorder %s19, %s22
    %p28 = scmp.eq.s32.totalorder %s9, 0
    %p29 = por %p27, %p28
    %p30 = scmp.ne.s32.totalorder %s19, %s22
    %p31 = scmp.eq.s32.totalorder %s14, 1
    %p32 = por %p30, %p31
    %p33 = scmp.ne.s32.totalorder %s22, %s23
    %p34 = scmp.eq.s32.totalorder %s14, 0
    %p35 = por %p33, %p34
    %p36 = scmp.ne.s32.totalorder %s22, %s23
    %p37 = scmp.eq.s32.totalorder %s15, 1
    %p38 = por %p36, %p37
    %p40 = scmp.ne.s32.totalorder %s23, %s39
    %p41 = scmp.eq.s32.totalorder %s15, 0
    %p42 = por %p40, %p41
    %s44 = sadd.s32 %s43, 1
    %p47 = scmp.eq.s32.totalorder %s9, 1
    %p48 = scmp.ne.s32.totalorder %s43, %s45
    %p49 = scmp.eq.s32.totalorder %s9, 0
    %p50 = por %p48, %p49
    %p51 = scmp.ne.s32.totalorder %s43, %s45
    %p52 = scmp.eq.s32.totalorder %s14, 1
    %p53 = por %p51, %p52
    %p54 = scmp.ne.s32.totalorder %s45, %s46
    %p55 = scmp.eq.s32.totalorder %s14, 0
    %p56 = por %p54, %p55
    %p57 = scmp.ne.s32.totalorder %s45, %s46
    %p58 = scmp.eq.s32.totalorder %s15, 1
    %p59 = por %p57, %p58
    %p61 = scmp.ne.s32.totalorder %s46, %s60
    %p62 = scmp.eq.s32.totalorder %s15, 0
    %p63 = por %p61, %p62
    %s65 = sadd.s32 %s64, 1
    %p68 = scmp.eq.s32.totalorder %s9, 1
    %p69 = scmp.ne.s32.totalorder %s64, %s66
    %p70 = scmp.eq.s32.totalorder %s9, 0
    %p71 = por %p69, %p70
    %p72 = scmp.ne.s32.totalorder %s64, %s66
    %p73 = scmp.eq.s32.totalorder %s14, 1
    %p74 = por %p72, %p73
    %p75 = scmp.ne.s32.totalorder %s66, %s67
    %p76 = scmp.eq.s32.totalorder %s14, 0
    %p77 = por %p75, %p76
    %p78 = scmp.ne.s32.totalorder %s66, %s67
    %p79 = scmp.eq.s32.totalorder %s15, 1
    %p80 = por %p78, %p79
    %p82 = scmp.ne.s32.totalorder %s67, %s81
    %p83 = scmp.eq.s32.totalorder %s15, 0
    %p84 = por %p82, %p83
    %s85 = ssub.s32 %s9, %s16
    %p86 = scmp.eq.s32.totalorder %s85, 0
    %s88 = sadd.s32 %s87, 1
    %s89 = scalar_select %p86, %s87, %s88
    %p92 = pneg %p86
    %p93 = scmp.eq.s32.totalorder %s9, 1
    %p94 = por %p92, %p93
    %p95 = scmp.ne.s32.totalorder %s87, %s90
    %p96 = scmp.eq.s32.totalorder %s9, 0
    %p97 = por %p95, %p96
    %p98 = scmp.ne.s32.totalorder %s87, %s90
    %p99 = scmp.eq.s32.totalorder %s14, 1
    %p100 = por %p98, %p99
    %p101 = scmp.ne.s32.totalorder %s90, %s91
    %p102 = scmp.eq.s32.totalorder %s14, 0
    %p103 = por %p101, %p102
    %p104 = scmp.ne.s32.totalorder %s90, %s91
    %p105 = scmp.eq.s32.totalorder %s15, 1
    %p106 = por %p104, %p105
    %p108 = scmp.ne.s32.totalorder %s91, %s107
    %p109 = scmp.eq.s32.totalorder %s15, 0
    %p110 = por %p108, %p109
    %p111 = scmp.le.s32.totalorder 1, %s9
    %p112 = scmp.lt.s32.totalorder %s9, 3
    %p113 = pnand %p111, %p112
    %p114 = pneg %p113
    // Predicated region
    $region9: #{forward.1} parent=5 // pred_check
      _
    $region10: #{forward.1} parent=5 // pred_check_branch
      %116 = sbr.rel (%p113) target = $region12
    $region11: #{forward.1} parent=5 // pred_region
      %s117 = ssub.s32 %s9, 1
      // Predicated region
      $region13: #{forward.1} parent=11 // pred_check
        %p118 = pneg %p56
      $region14: #{forward.1} parent=11 // pred_check_branch
        %120 = sbr.rel (%p118) target = $region16
      $region15: #{forward.1} parent=11 // pred_region
        _
      $region16: #{forward.1} parent=11 // pred_fallthru
        _
      // Predicated region
      $region17: #{forward.1} parent=11 // pred_check
        %p121 = pneg %p77
      $region18: #{forward.1} parent=11 // pred_check_branch
        %123 = sbr.rel (%p121) target = $region20
      $region19: #{forward.1} parent=11 // pred_region
        _
      $region20: #{forward.1} parent=11 // pred_fallthru
        _
    $region12: #{forward.1} parent=5 // pred_fallthru
      _
    %p124 = scmp.lt.s32.totalorder %s9, 2
    // Predicated region
    $region21: #{forward.1} parent=5 // pred_check
      %p125 = pneg %p124
    $region22: #{forward.1} parent=5 // pred_check_branch
      %127 = sbr.rel (%p125) target = $region24
    $region23: #{forward.1} parent=5 // pred_region
      // Predicated region
      $region25: #{forward.1} parent=23 // pred_check
        %p128 = pneg %p29
      $region26: #{forward.1} parent=23 // pred_check_branch
        %130 = sbr.rel (%p128) target = $region28
      $region27: #{forward.1} parent=23 // pred_region
        %p131 = scmp.lt.s32.totalorder %s9, 1
        %s132 = scalar_select %p131, %s9, 1
        %s133 = smul.addr %s132, 3
        %s134 = smul.addr %s133, 4
        %s135 = scalar_lea.vmem %s0, %s134
      $region28: #{forward.1} parent=23 // pred_fallthru
        _
    $region24: #{forward.1} parent=5 // pred_fallthru
      _
    %p136 = scmp.le.s32.totalorder 1, %s9
    %p137 = scmp.lt.s32.totalorder %s9, 3
    %p138 = pnand %p136, %p137
    %p139 = pneg %p138
    // Predicated region
    $region29: #{forward.1} parent=5 // pred_check
      _
    $region30: #{forward.1} parent=5 // pred_check_branch
      %141 = sbr.rel (%p138) target = $region32
    $region31: #{forward.1} parent=5 // pred_region
      %s142 = ssub.s32 %s9, 1
      %p143 = scmp.lt.s32.totalorder %s14, 1
      %s144 = scalar_select %p143, %s14, 1
      %s145 = smul.addr %s144, 3
      %s146 = smul.addr %s145, 4
      %s147 = scalar_lea.vmem %s0, %s146
      %p148 = pneg %p35
      %p149 = pneg %p32
      %p150 = pneg %p56
      %p151 = pneg %p53
      %p152 = pneg %p77
      %p153 = pneg %p74
      %p154 = pneg %p103
      %p155 = pneg %p100
      %p156 = scmp.lt.s32.totalorder %s14, 1
      %s157 = scalar_select %p156, %s14, 1
      %s158 = smul.addr %s157, 3
      %s159 = smul.addr %s158, 8
      %s160 = scalar_lea.vmem %s3, %s159
      %p161 = scmp.lt.s32.totalorder %s14, 1
      %s162 = scalar_select %p161, %s14, 1
      %s163 = smul.addr %s162, 3
      %s164 = smul.addr %s163, 4
      %s165 = scalar_lea.vmem %s0, %s164
      %p166 = scmp.lt.s32.totalorder %s14, 1
      %s167 = scalar_select %p166, %s14, 1
      %s168 = smul.addr %s167, 3
      %s169 = smul.addr %s168, 8
      %s170 = scalar_lea.vmem %s3, %s169
      %v171 = vld [vmem:[%s165] sm:$0xff]
      %v172 = vld [vmem:[%s165 + $0x8] sm:$0xf]
      %v173 = vld [vmem:[%s1] sm:$0xff]
      %s174 = scalar_lea.vmem %s1, 8
      %v175 = vld [vmem:[%s174] sm:$0xff]
      %v178 = vcombine.high %v171, %v171
      %179 = vrot.lane.b32.xlu0 %v171, 127
      %v180 = vpop.permute.xlu0 %179
      %181 = vrot.lane.b32.xlu0 %v178, 127
      %v182 = vpop.permute.xlu0 %181
      %183 = vrot.lane.b32.xlu0 %v172, 127
      %v184 = vpop.permute.xlu0 %183
      %vm185 = vcmask 1039360
      %v186 = vsel %vm185, %v180, %v182
      %v187 = vsel %vm185, %v182, %v184
      %vm188 = vcmask 31744
      %v190 = vsel %vm188, %v175, 0
      %vm192 = vcmask 1043456
      %v193 = vsel %vm192, %v186, 0
      %v195 = vsel %vm192, %v187, 0
      %v197 = vsel %vm192, %v184, 0
      %199 = vmatprep.subr.mxu0 0.0
      %200 = vmatpush1.msra.mxu0 0.0
      %201 = vmatprep.subr.mxu0 0.0
      %202 = vmatpush1.msra.mxu0 0.0
      %203 = vmatprep.subr.mxu0 0.0
      %204 = vmatpush1.msra.mxu0 0.0
      %205 = vmatprep.subr.mxu0 0.0
      %206 = vmatpush1.msra.mxu0 0.0
      %207 = vmatprep.subr.mxu0 0.0
      %208 = vmatpush1.msra.mxu0 0.0
      %209 = vmatprep.subr.mxu0 0.0
      %210 = vmatpush1.msra.mxu0 0.0
      %211 = vmatprep.subr.mxu0 0.0
      %212 = vmatpush1.msra.mxu0 0.0
      %213 = vmatprep.subr.mxu0 0.0
      %214 = vmatpush1.msra.mxu0 0.0
      %215 = vmatprep.subr.mxu0 0.0
      %216 = vmatpush1.msra.mxu0 0.0
      %217 = vmatprep.subr.mxu0 0.0
      %218 = vmatpush1.msra.mxu0 0.0
      %219 = vmatprep.subr.mxu0 0.0
      %220 = vmatpush1.msra.mxu0 0.0
      %221 = vmatprep.subr.mxu0 0.0
      %222 = vmatpush1.msra.mxu0 0.0
      %223 = vmatprep.subr.mxu0 0.0
      %224 = vmatpush1.msra.mxu0 0.0
      %225 = vmatprep.subr.mxu0 0.0
      %226 = vmatpush1.msra.mxu0 0.0
      %227 = vmatprep.subr.mxu0 0.0
      %228 = vmatpush1.msra.mxu0 0.0
      %229 = vmatprep.subr.mxu0 %v195
      %230 = vmatpush1.msra.mxu0 %v193
      %231 = vmatprep.subr.mxu0 0.0
      %232 = vmatpush2.msra.mxu0 0.0
      %233 = vmatprep.subr.mxu0 0.0
      %234 = vmatpush2.msra.mxu0 0.0
      %235 = vmatprep.subr.mxu0 0.0
      %236 = vmatpush2.msra.mxu0 0.0
      %237 = vmatprep.subr.mxu0 0.0
      %238 = vmatpush2.msra.mxu0 0.0
      %239 = vmatprep.subr.mxu0 0.0
      %240 = vmatpush2.msra.mxu0 0.0
      %241 = vmatprep.subr.mxu0 0.0
      %242 = vmatpush2.msra.mxu0 0.0
      %243 = vmatprep.subr.mxu0 0.0
      %244 = vmatpush2.msra.mxu0 0.0
      %245 = vmatprep.subr.mxu0 0.0
      %246 = vmatpush2.msra.mxu0 0.0
      %247 = vmatprep.subr.mxu0 0.0
      %248 = vmatpush2.msra.mxu0 0.0
      %249 = vmatprep.subr.mxu0 0.0
      %250 = vmatpush2.msra.mxu0 0.0
      %251 = vmatprep.subr.mxu0 0.0
      %252 = vmatpush2.msra.mxu0 0.0
      %253 = vmatprep.subr.mxu0 0.0
      %254 = vmatpush2.msra.mxu0 0.0
      %255 = vmatprep.subr.mxu0 0.0
      %256 = vmatpush2.msra.mxu0 0.0
      %257 = vmatprep.subr.mxu0 0.0
      %258 = vmatpush2.msra.mxu0 0.0
      %259 = vmatprep.subr.mxu0 0.0
      %260 = vmatpush2.msra.mxu0 0.0
      %261 = vmatprep.subr.mxu0 0.0
      %262 = vmatpush2.msra.mxu0 0.0
      %263 = vmatprep.mubr.f32.mxu0 0.0
      %264 = vmatmul.mubr.f32.gmra.mxu0 %v190
      %v265 = vpop.f32.mrf.mxu0
      %v266 = vadd.f32 0.0, %v265
      %v267 = vpop.f32.mrf.mxu0
      %v268 = vadd.f32 0.0, %v267
      %269 = vdwg.mxu0
      %270 = vmatprep.subr.mxu0 0.0
      %271 = vmatpush1.msra.mxu0 0.0
      %272 = vmatprep.subr.mxu0 0.0
      %273 = vmatpush1.msra.mxu0 0.0
      %274 = vmatprep.subr.mxu0 0.0
      %275 = vmatpush1.msra.mxu0 0.0
      %276 = vmatprep.subr.mxu0 0.0
      %277 = vmatpush1.msra.mxu0 0.0
      %278 = vmatprep.subr.mxu0 0.0
      %279 = vmatpush1.msra.mxu0 0.0
      %280 = vmatprep.subr.mxu0 0.0
      %281 = vmatpush1.msra.mxu0 0.0
      %282 = vmatprep.subr.mxu0 0.0
      %283 = vmatpush1.msra.mxu0 0.0
      %284 = vmatprep.subr.mxu0 0.0
      %285 = vmatpush1.msra.mxu0 0.0
      %286 = vmatprep.subr.mxu0 0.0
      %287 = vmatpush1.msra.mxu0 0.0
      %288 = vmatprep.subr.mxu0 0.0
      %289 = vmatpush1.msra.mxu0 0.0
      %290 = vmatprep.subr.mxu0 0.0
      %291 = vmatpush1.msra.mxu0 0.0
      %292 = vmatprep.subr.mxu0 0.0
      %293 = vmatpush1.msra.mxu0 0.0
      %294 = vmatprep.subr.mxu0 0.0
      %295 = vmatpush1.msra.mxu0 0.0
      %296 = vmatprep.subr.mxu0 0.0
      %297 = vmatpush1.msra.mxu0 0.0
      %298 = vmatprep.subr.mxu0 0.0
      %299 = vmatpush1.msra.mxu0 0.0
      %300 = vmatprep.subr.mxu0 0.0
      %301 = vmatpush1.msra.mxu0 %v197
      %302 = vmatprep.subr.mxu0 0.0
      %303 = vmatpush2.msra.mxu0 0.0
      %304 = vmatprep.subr.mxu0 0.0
      %305 = vmatpush2.msra.mxu0 0.0
      %306 = vmatprep.subr.mxu0 0.0
      %307 = vmatpush2.msra.mxu0 0.0
      %308 = vmatprep.subr.mxu0 0.0
      %309 = vmatpush2.msra.mxu0 0.0
      %310 = vmatprep.subr.mxu0 0.0
      %311 = vmatpush2.msra.mxu0 0.0
      %312 = vmatprep.subr.mxu0 0.0
      %313 = vmatpush2.msra.mxu0 0.0
      %314 = vmatprep.subr.mxu0 0.0
      %315 = vmatpush2.msra.mxu0 0.0
      %316 = vmatprep.subr.mxu0 0.0
      %317 = vmatpush2.msra.mxu0 0.0
      %318 = vmatprep.subr.mxu0 0.0
      %319 = vmatpush2.msra.mxu0 0.0
      %320 = vmatprep.subr.mxu0 0.0
      %321 = vmatpush2.msra.mxu0 0.0
      %322 = vmatprep.subr.mxu0 0.0
      %323 = vmatpush2.msra.mxu0 0.0
      %324 = vmatprep.subr.mxu0 0.0
      %325 = vmatpush2.msra.mxu0 0.0
      %326 = vmatprep.subr.mxu0 0.0
      %327 = vmatpush2.msra.mxu0 0.0
      %328 = vmatprep.subr.mxu0 0.0
      %329 = vmatpush2.msra.mxu0 0.0
      %330 = vmatprep.subr.mxu0 0.0
      %331 = vmatpush2.msra.mxu0 0.0
      %332 = vmatprep.subr.mxu0 0.0
      %333 = vmatpush2.msra.mxu0 0.0
      %334 = vmatprep.mubr.f32.mxu0 0.0
      %335 = vmatmul.mubr.f32.gmra.mxu0 %v190
      %v336 = vpop.f32.mrf.mxu0
      %v337 = vadd.f32 0.0, %v336
      %v338 = vpop.f32.mrf.mxu0
      %339 = vdwg.mxu0
      %v341 = vsel %vm188, %v173, 0
      %v343 = vsel %vm192, %v171, 0
      %v345 = vsel %vm192, %v178, 0
      %v347 = vsel %vm192, %v172, 0
      %349 = vmatprep.subr.mxu0 0.0
      %350 = vmatpush1.msra.mxu0 0.0
      %351 = vmatprep.subr.mxu0 0.0
      %352 = vmatpush1.msra.mxu0 0.0
      %353 = vmatprep.subr.mxu0 0.0
      %354 = vmatpush1.msra.mxu0 0.0
      %355 = vmatprep.subr.mxu0 0.0
      %356 = vmatpush1.msra.mxu0 0.0
      %357 = vmatprep.subr.mxu0 0.0
      %358 = vmatpush1.msra.mxu0 0.0
      %359 = vmatprep.subr.mxu0 0.0
      %360 = vmatpush1.msra.mxu0 0.0
      %361 = vmatprep.subr.mxu0 0.0
      %362 = vmatpush1.msra.mxu0 0.0
      %363 = vmatprep.subr.mxu0 0.0
      %364 = vmatpush1.msra.mxu0 0.0
      %365 = vmatprep.subr.mxu0 0.0
      %366 = vmatpush1.msra.mxu0 0.0
      %367 = vmatprep.subr.mxu0 0.0
      %368 = vmatpush1.msra.mxu0 0.0
      %369 = vmatprep.subr.mxu0 0.0
      %370 = vmatpush1.msra.mxu0 0.0
      %371 = vmatprep.subr.mxu0 0.0
      %372 = vmatpush1.msra.mxu0 0.0
      %373 = vmatprep.subr.mxu0 0.0
      %374 = vmatpush1.msra.mxu0 0.0
      %375 = vmatprep.subr.mxu0 0.0
      %376 = vmatpush1.msra.mxu0 0.0
      %377 = vmatprep.subr.mxu0 0.0
      %378 = vmatpush1.msra.mxu0 0.0
      %379 = vmatprep.subr.mxu0 %v345
      %380 = vmatpush1.msra.mxu0 %v343
      %381 = vmatprep.subr.mxu0 0.0
      %382 = vmatpush2.msra.mxu0 0.0
      %383 = vmatprep.subr.mxu0 0.0
      %384 = vmatpush2.msra.mxu0 0.0
      %385 = vmatprep.subr.mxu0 0.0
      %386 = vmatpush2.msra.mxu0 0.0
      %387 = vmatprep.subr.mxu0 0.0
      %388 = vmatpush2.msra.mxu0 0.0
      %389 = vmatprep.subr.mxu0 0.0
      %390 = vmatpush2.msra.mxu0 0.0
      %391 = vmatprep.subr.mxu0 0.0
      %392 = vmatpush2.msra.mxu0 0.0
      %393 = vmatprep.subr.mxu0 0.0
      %394 = vmatpush2.msra.mxu0 0.0
      %395 = vmatprep.subr.mxu0 0.0
      %396 = vmatpush2.msra.mxu0 0.0
      %397 = vmatprep.subr.mxu0 0.0
      %398 = vmatpush2.msra.mxu0 0.0
      %399 = vmatprep.subr.mxu0 0.0
      %400 = vmatpush2.msra.mxu0 0.0
      %401 = vmatprep.subr.mxu0 0.0
      %402 = vmatpush2.msra.mxu0 0.0
      %403 = vmatprep.subr.mxu0 0.0
      %404 = vmatpush2.msra.mxu0 0.0
      %405 = vmatprep.subr.mxu0 0.0
      %406 = vmatpush2.msra.mxu0 0.0
      %407 = vmatprep.subr.mxu0 0.0
      %408 = vmatpush2.msra.mxu0 0.0
      %409 = vmatprep.subr.mxu0 0.0
      %410 = vmatpush2.msra.mxu0 0.0
      %411 = vmatprep.subr.mxu0 0.0
      %412 = vmatpush2.msra.mxu0 0.0
      %413 = vmatprep.mubr.f32.mxu0 0.0
      %414 = vmatmul.mubr.f32.gmra.mxu0 %v341
      %v415 = vpop.f32.mrf.mxu0
      %v416 = vadd.f32 %v266, %v415
      %v417 = vpop.f32.mrf.mxu0
      %v418 = vadd.f32 %v268, %v417
      %419 = vdwg.mxu0
      %420 = vmatprep.subr.mxu0 0.0
      %421 = vmatpush1.msra.mxu0 0.0
      %422 = vmatprep.subr.mxu0 0.0
      %423 = vmatpush1.msra.mxu0 0.0
      %424 = vmatprep.subr.mxu0 0.0
      %425 = vmatpush1.msra.mxu0 0.0
      %426 = vmatprep.subr.mxu0 0.0
      %427 = vmatpush1.msra.mxu0 0.0
      %428 = vmatprep.subr.mxu0 0.0
      %429 = vmatpush1.msra.mxu0 0.0
      %430 = vmatprep.subr.mxu0 0.0
      %431 = vmatpush1.msra.mxu0 0.0
      %432 = vmatprep.subr.mxu0 0.0
      %433 = vmatpush1.msra.mxu0 0.0
      %434 = vmatprep.subr.mxu0 0.0
      %435 = vmatpush1.msra.mxu0 0.0
      %436 = vmatprep.subr.mxu0 0.0
      %437 = vmatpush1.msra.mxu0 0.0
      %438 = vmatprep.subr.mxu0 0.0
      %439 = vmatpush1.msra.mxu0 0.0
      %440 = vmatprep.subr.mxu0 0.0
      %441 = vmatpush1.msra.mxu0 0.0
      %442 = vmatprep.subr.mxu0 0.0
      %443 = vmatpush1.msra.mxu0 0.0
      %444 = vmatprep.subr.mxu0 0.0
      %445 = vmatpush1.msra.mxu0 0.0
      %446 = vmatprep.subr.mxu0 0.0
      %447 = vmatpush1.msra.mxu0 0.0
      %448 = vmatprep.subr.mxu0 0.0
      %449 = vmatpush1.msra.mxu0 0.0
      %450 = vmatprep.subr.mxu0 0.0
      %451 = vmatpush1.msra.mxu0 %v347
      %452 = vmatprep.subr.mxu0 0.0
      %453 = vmatpush2.msra.mxu0 0.0
      %454 = vmatprep.subr.mxu0 0.0
      %455 = vmatpush2.msra.mxu0 0.0
      %456 = vmatprep.subr.mxu0 0.0
      %457 = vmatpush2.msra.mxu0 0.0
      %458 = vmatprep.subr.mxu0 0.0
      %459 = vmatpush2.msra.mxu0 0.0
      %460 = vmatprep.subr.mxu0 0.0
      %461 = vmatpush2.msra.mxu0 0.0
      %462 = vmatprep.subr.mxu0 0.0
      %463 = vmatpush2.msra.mxu0 0.0
      %464 = vmatprep.subr.mxu0 0.0
      %465 = vmatpush2.msra.mxu0 0.0
      %466 = vmatprep.subr.mxu0 0.0
      %467 = vmatpush2.msra.mxu0 0.0
      %468 = vmatprep.subr.mxu0 0.0
      %469 = vmatpush2.msra.mxu0 0.0
      %470 = vmatprep.subr.mxu0 0.0
      %471 = vmatpush2.msra.mxu0 0.0
      %472 = vmatprep.subr.mxu0 0.0
      %473 = vmatpush2.msra.mxu0 0.0
      %474 = vmatprep.subr.mxu0 0.0
      %475 = vmatpush2.msra.mxu0 0.0
      %476 = vmatprep.subr.mxu0 0.0
      %477 = vmatpush2.msra.mxu0 0.0
      %478 = vmatprep.subr.mxu0 0.0
      %479 = vmatpush2.msra.mxu0 0.0
      %480 = vmatprep.subr.mxu0 0.0
      %481 = vmatpush2.msra.mxu0 0.0
      %482 = vmatprep.subr.mxu0 0.0
      %483 = vmatpush2.msra.mxu0 0.0
      %484 = vmatprep.mubr.f32.mxu0 0.0
      %485 = vmatmul.mubr.f32.gmra.mxu0 %v341
      %v486 = vpop.f32.mrf.mxu0
      %v487 = vadd.f32 %v337, %v486
      %v488 = vpop.f32.mrf.mxu0
      %489 = vdwg.mxu0
      %v490 = vld [vmem:[%s165] sm:$0xff]
      %v491 = vld [vmem:[%s165 + $0x8] sm:$0xf]
      %s492 = scalar_lea.vmem %s1, 16
      %v493 = vld [vmem:[%s492] sm:$0xff]
      %v496 = vcombine.high %v490, %v490
      %497 = vrot.lane.b32.xlu0 %v490, 126
      %v498 = vpop.permute.xlu0 %497
      %499 = vrot.lane.b32.xlu0 %v496, 126
      %v500 = vpop.permute.xlu0 %499
      %501 = vrot.lane.b32.xlu0 %v491, 126
      %v502 = vpop.permute.xlu0 %501
      %vm503 = vcmask 1031168
      %v504 = vsel %vm503, %v498, %v500
      %v505 = vsel %vm503, %v500, %v502
      %v507 = vsel %vm188, %v493, 0
      %v509 = vsel %vm192, %v504, 0
      %v511 = vsel %vm192, %v505, 0
      %v513 = vsel %vm192, %v502, 0
      %515 = vmatprep.subr.mxu0 0.0
      %516 = vmatpush1.msra.mxu0 0.0
      %517 = vmatprep.subr.mxu0 0.0
      %518 = vmatpush1.msra.mxu0 0.0
      %519 = vmatprep.subr.mxu0 0.0
      %520 = vmatpush1.msra.mxu0 0.0
      %521 = vmatprep.subr.mxu0 0.0
      %522 = vmatpush1.msra.mxu0 0.0
      %523 = vmatprep.subr.mxu0 0.0
      %524 = vmatpush1.msra.mxu0 0.0
      %525 = vmatprep.subr.mxu0 0.0
      %526 = vmatpush1.msra.mxu0 0.0
      %527 = vmatprep.subr.mxu0 0.0
      %528 = vmatpush1.msra.mxu0 0.0
      %529 = vmatprep.subr.mxu0 0.0
      %530 = vmatpush1.msra.mxu0 0.0
      %531 = vmatprep.subr.mxu0 0.0
      %532 = vmatpush1.msra.mxu0 0.0
      %533 = vmatprep.subr.mxu0 0.0
      %534 = vmatpush1.msra.mxu0 0.0
      %535 = vmatprep.subr.mxu0 0.0
      %536 = vmatpush1.msra.mxu0 0.0
      %537 = vmatprep.subr.mxu0 0.0
      %538 = vmatpush1.msra.mxu0 0.0
      %539 = vmatprep.subr.mxu0 0.0
      %540 = vmatpush1.msra.mxu0 0.0
      %541 = vmatprep.subr.mxu0 0.0
      %542 = vmatpush1.msra.mxu0 0.0
      %543 = vmatprep.subr.mxu0 0.0
      %544 = vmatpush1.msra.mxu0 0.0
      %545 = vmatprep.subr.mxu0 %v511
      %546 = vmatpush1.msra.mxu0 %v509
      %547 = vmatprep.subr.mxu0 0.0
      %548 = vmatpush2.msra.mxu0 0.0
      %549 = vmatprep.subr.mxu0 0.0
      %550 = vmatpush2.msra.mxu0 0.0
      %551 = vmatprep.subr.mxu0 0.0
      %552 = vmatpush2.msra.mxu0 0.0
      %553 = vmatprep.subr.mxu0 0.0
      %554 = vmatpush2.msra.mxu0 0.0
      %555 = vmatprep.subr.mxu0 0.0
      %556 = vmatpush2.msra.mxu0 0.0
      %557 = vmatprep.subr.mxu0 0.0
      %558 = vmatpush2.msra.mxu0 0.0
      %559 = vmatprep.subr.mxu0 0.0
      %560 = vmatpush2.msra.mxu0 0.0
      %561 = vmatprep.subr.mxu0 0.0
      %562 = vmatpush2.msra.mxu0 0.0
      %563 = vmatprep.subr.mxu0 0.0
      %564 = vmatpush2.msra.mxu0 0.0
      %565 = vmatprep.subr.mxu0 0.0
      %566 = vmatpush2.msra.mxu0 0.0
      %567 = vmatprep.subr.mxu0 0.0
      %568 = vmatpush2.msra.mxu0 0.0
      %569 = vmatprep.subr.mxu0 0.0
      %570 = vmatpush2.msra.mxu0 0.0
      %571 = vmatprep.subr.mxu0 0.0
      %572 = vmatpush2.msra.mxu0 0.0
      %573 = vmatprep.subr.mxu0 0.0
      %574 = vmatpush2.msra.mxu0 0.0
      %575 = vmatprep.subr.mxu0 0.0
      %576 = vmatpush2.msra.mxu0 0.0
      %577 = vmatprep.subr.mxu0 0.0
      %578 = vmatpush2.msra.mxu0 0.0
      %579 = vmatprep.mubr.f32.mxu0 0.0
      %580 = vmatmul.mubr.f32.gmra.mxu0 %v507
      %v581 = vpop.f32.mrf.mxu0
      %v582 = vadd.f32 0.0, %v581
      %v583 = vpop.f32.mrf.mxu0
      %v584 = vadd.f32 0.0, %v583
      %585 = vdwg.mxu0
      %586 = vmatprep.subr.mxu0 0.0
      %587 = vmatpush1.msra.mxu0 0.0
      %588 = vmatprep.subr.mxu0 0.0
      %589 = vmatpush1.msra.mxu0 0.0
      %590 = vmatprep.subr.mxu0 0.0
      %591 = vmatpush1.msra.mxu0 0.0
      %592 = vmatprep.subr.mxu0 0.0
      %593 = vmatpush1.msra.mxu0 0.0
      %594 = vmatprep.subr.mxu0 0.0
      %595 = vmatpush1.msra.mxu0 0.0
      %596 = vmatprep.subr.mxu0 0.0
      %597 = vmatpush1.msra.mxu0 0.0
      %598 = vmatprep.subr.mxu0 0.0
      %599 = vmatpush1.msra.mxu0 0.0
      %600 = vmatprep.subr.mxu0 0.0
      %601 = vmatpush1.msra.mxu0 0.0
      %602 = vmatprep.subr.mxu0 0.0
      %603 = vmatpush1.msra.mxu0 0.0
      %604 = vmatprep.subr.mxu0 0.0
      %605 = vmatpush1.msra.mxu0 0.0
      %606 = vmatprep.subr.mxu0 0.0
      %607 = vmatpush1.msra.mxu0 0.0
      %608 = vmatprep.subr.mxu0 0.0
      %609 = vmatpush1.msra.mxu0 0.0
      %610 = vmatprep.subr.mxu0 0.0
      %611 = vmatpush1.msra.mxu0 0.0
      %612 = vmatprep.subr.mxu0 0.0
      %613 = vmatpush1.msra.mxu0 0.0
      %614 = vmatprep.subr.mxu0 0.0
      %615 = vmatpush1.msra.mxu0 0.0
      %616 = vmatprep.subr.mxu0 0.0
      %617 = vmatpush1.msra.mxu0 %v513
      %618 = vmatprep.subr.mxu0 0.0
      %619 = vmatpush2.msra.mxu0 0.0
      %620 = vmatprep.subr.mxu0 0.0
      %621 = vmatpush2.msra.mxu0 0.0
      %622 = vmatprep.subr.mxu0 0.0
      %623 = vmatpush2.msra.mxu0 0.0
      %624 = vmatprep.subr.mxu0 0.0
      %625 = vmatpush2.msra.mxu0 0.0
      %626 = vmatprep.subr.mxu0 0.0
      %627 = vmatpush2.msra.mxu0 0.0
      %628 = vmatprep.subr.mxu0 0.0
      %629 = vmatpush2.msra.mxu0 0.0
      %630 = vmatprep.subr.mxu0 0.0
      %631 = vmatpush2.msra.mxu0 0.0
      %632 = vmatprep.subr.mxu0 0.0
      %633 = vmatpush2.msra.mxu0 0.0
      %634 = vmatprep.subr.mxu0 0.0
      %635 = vmatpush2.msra.mxu0 0.0
      %636 = vmatprep.subr.mxu0 0.0
      %637 = vmatpush2.msra.mxu0 0.0
      %638 = vmatprep.subr.mxu0 0.0
      %639 = vmatpush2.msra.mxu0 0.0
      %640 = vmatprep.subr.mxu0 0.0
      %641 = vmatpush2.msra.mxu0 0.0
      %642 = vmatprep.subr.mxu0 0.0
      %643 = vmatpush2.msra.mxu0 0.0
      %644 = vmatprep.subr.mxu0 0.0
      %645 = vmatpush2.msra.mxu0 0.0
      %646 = vmatprep.subr.mxu0 0.0
      %647 = vmatpush2.msra.mxu0 0.0
      %648 = vmatprep.subr.mxu0 0.0
      %649 = vmatpush2.msra.mxu0 0.0
      %650 = vmatprep.mubr.f32.mxu0 0.0
      %651 = vmatmul.mubr.f32.gmra.mxu0 %v507
      %v652 = vpop.f32.mrf.mxu0
      %v653 = vadd.f32 0.0, %v652
      %v654 = vpop.f32.mrf.mxu0
      %655 = vdwg.mxu0
      %v656 = vadd.f32 %v416, %v582
      %v657 = vadd.f32 %v418, %v584
      %v658 = vadd.f32 %v487, %v653
      %v659 = vld [vmem:[%s165] sm:$0xff]
      %v660 = vld [vmem:[%s165 + $0x8] sm:$0xf]
      %s661 = scalar_lea.vmem %s1, 24
      %v662 = vld [vmem:[%s661] sm:$0xff]
      %v665 = vcombine.high %v659, %v659
      %666 = vrot.lane.b32.xlu0 %v659, 110
      %v667 = vpop.permute.xlu0 %666
      %668 = vrot.lane.b32.xlu0 %v665, 110
      %v669 = vpop.permute.xlu0 %668
      %670 = vrot.lane.b32.xlu0 %v660, 110
      %v671 = vpop.permute.xlu0 %670
      %vm672 = vcmask 900096
      %v673 = vsel %vm672, %v667, %v669
      %v674 = vsel %vm672, %v669, %v671
      %v676 = vsel %vm188, %v662, 0
      %v678 = vsel %vm192, %v673, 0
      %v680 = vsel %vm192, %v674, 0
      %v682 = vsel %vm192, %v671, 0
      %684 = vmatprep.subr.mxu0 0.0
      %685 = vmatpush1.msra.mxu0 0.0
      %686 = vmatprep.subr.mxu0 0.0
      %687 = vmatpush1.msra.mxu0 0.0
      %688 = vmatprep.subr.mxu0 0.0
      %689 = vmatpush1.msra.mxu0 0.0
      %690 = vmatprep.subr.mxu0 0.0
      %691 = vmatpush1.msra.mxu0 0.0
      %692 = vmatprep.subr.mxu0 0.0
      %693 = vmatpush1.msra.mxu0 0.0
      %694 = vmatprep.subr.mxu0 0.0
      %695 = vmatpush1.msra.mxu0 0.0
      %696 = vmatprep.subr.mxu0 0.0
      %697 = vmatpush1.msra.mxu0 0.0
      %698 = vmatprep.subr.mxu0 0.0
      %699 = vmatpush1.msra.mxu0 0.0
      %700 = vmatprep.subr.mxu0 0.0
      %701 = vmatpush1.msra.mxu0 0.0
      %702 = vmatprep.subr.mxu0 0.0
      %703 = vmatpush1.msra.mxu0 0.0
      %704 = vmatprep.subr.mxu0 0.0
      %705 = vmatpush1.msra.mxu0 0.0
      %706 = vmatprep.subr.mxu0 0.0
      %707 = vmatpush1.msra.mxu0 0.0
      %708 = vmatprep.subr.mxu0 0.0
      %709 = vmatpush1.msra.mxu0 0.0
      %710 = vmatprep.subr.mxu0 0.0
      %711 = vmatpush1.msra.mxu0 0.0
      %712 = vmatprep.subr.mxu0 0.0
      %713 = vmatpush1.msra.mxu0 0.0
      %714 = vmatprep.subr.mxu0 %v680
      %715 = vmatpush1.msra.mxu0 %v678
      %716 = vmatprep.subr.mxu0 0.0
      %717 = vmatpush2.msra.mxu0 0.0
      %718 = vmatprep.subr.mxu0 0.0
      %719 = vmatpush2.msra.mxu0 0.0
      %720 = vmatprep.subr.mxu0 0.0
      %721 = vmatpush2.msra.mxu0 0.0
      %722 = vmatprep.subr.mxu0 0.0
      %723 = vmatpush2.msra.mxu0 0.0
      %724 = vmatprep.subr.mxu0 0.0
      %725 = vmatpush2.msra.mxu0 0.0
      %726 = vmatprep.subr.mxu0 0.0
      %727 = vmatpush2.msra.mxu0 0.0
      %728 = vmatprep.subr.mxu0 0.0
      %729 = vmatpush2.msra.mxu0 0.0
      %730 = vmatprep.subr.mxu0 0.0
      %731 = vmatpush2.msra.mxu0 0.0
      %732 = vmatprep.subr.mxu0 0.0
      %733 = vmatpush2.msra.mxu0 0.0
      %734 = vmatprep.subr.mxu0 0.0
      %735 = vmatpush2.msra.mxu0 0.0
      %736 = vmatprep.subr.mxu0 0.0
      %737 = vmatpush2.msra.mxu0 0.0
      %738 = vmatprep.subr.mxu0 0.0
      %739 = vmatpush2.msra.mxu0 0.0
      %740 = vmatprep.subr.mxu0 0.0
      %741 = vmatpush2.msra.mxu0 0.0
      %742 = vmatprep.subr.mxu0 0.0
      %743 = vmatpush2.msra.mxu0 0.0
      %744 = vmatprep.subr.mxu0 0.0
      %745 = vmatpush2.msra.mxu0 0.0
      %746 = vmatprep.subr.mxu0 0.0
      %747 = vmatpush2.msra.mxu0 0.0
      %748 = vmatprep.mubr.f32.mxu0 0.0
      %749 = vmatmul.mubr.f32.gmra.mxu0 %v676
      %v750 = vpop.f32.mrf.mxu0
      %v751 = vadd.f32 0.0, %v750
      %v752 = vpop.f32.mrf.mxu0
      %v753 = vadd.f32 0.0, %v752
      %754 = vdwg.mxu0
      %755 = vmatprep.subr.mxu0 0.0
      %756 = vmatpush1.msra.mxu0 0.0
      %757 = vmatprep.subr.mxu0 0.0
      %758 = vmatpush1.msra.mxu0 0.0
      %759 = vmatprep.subr.mxu0 0.0
      %760 = vmatpush1.msra.mxu0 0.0
      %761 = vmatprep.subr.mxu0 0.0
      %762 = vmatpush1.msra.mxu0 0.0
      %763 = vmatprep.subr.mxu0 0.0
      %764 = vmatpush1.msra.mxu0 0.0
      %765 = vmatprep.subr.mxu0 0.0
      %766 = vmatpush1.msra.mxu0 0.0
      %767 = vmatprep.subr.mxu0 0.0
      %768 = vmatpush1.msra.mxu0 0.0
      %769 = vmatprep.subr.mxu0 0.0
      %770 = vmatpush1.msra.mxu0 0.0
      %771 = vmatprep.subr.mxu0 0.0
      %772 = vmatpush1.msra.mxu0 0.0
      %773 = vmatprep.subr.mxu0 0.0
      %774 = vmatpush1.msra.mxu0 0.0
      %775 = vmatprep.subr.mxu0 0.0
      %776 = vmatpush1.msra.mxu0 0.0
      %777 = vmatprep.subr.mxu0 0.0
      %778 = vmatpush1.msra.mxu0 0.0
      %779 = vmatprep.subr.mxu0 0.0
      %780 = vmatpush1.msra.mxu0 0.0
      %781 = vmatprep.subr.mxu0 0.0
      %782 = vmatpush1.msra.mxu0 0.0
      %783 = vmatprep.subr.mxu0 0.0
      %784 = vmatpush1.msra.mxu0 0.0
      %785 = vmatprep.subr.mxu0 0.0
      %786 = vmatpush1.msra.mxu0 %v682
      %787 = vmatprep.subr.mxu0 0.0
      %788 = vmatpush2.msra.mxu0 0.0
      %789 = vmatprep.subr.mxu0 0.0
      %790 = vmatpush2.msra.mxu0 0.0
      %791 = vmatprep.subr.mxu0 0.0
      %792 = vmatpush2.msra.mxu0 0.0
      %793 = vmatprep.subr.mxu0 0.0
      %794 = vmatpush2.msra.mxu0 0.0
      %795 = vmatprep.subr.mxu0 0.0
      %796 = vmatpush2.msra.mxu0 0.0
      %797 = vmatprep.subr.mxu0 0.0
      %798 = vmatpush2.msra.mxu0 0.0
      %799 = vmatprep.subr.mxu0 0.0
      %800 = vmatpush2.msra.mxu0 0.0
      %801 = vmatprep.subr.mxu0 0.0
      %802 = vmatpush2.msra.mxu0 0.0
      %803 = vmatprep.subr.mxu0 0.0
      %804 = vmatpush2.msra.mxu0 0.0
      %805 = vmatprep.subr.mxu0 0.0
      %806 = vmatpush2.msra.mxu0 0.0
      %807 = vmatprep.subr.mxu0 0.0
      %808 = vmatpush2.msra.mxu0 0.0
      %809 = vmatprep.subr.mxu0 0.0
      %810 = vmatpush2.msra.mxu0 0.0
      %811 = vmatprep.subr.mxu0 0.0
      %812 = vmatpush2.msra.mxu0 0.0
      %813 = vmatprep.subr.mxu0 0.0
      %814 = vmatpush2.msra.mxu0 0.0
      %815 = vmatprep.subr.mxu0 0.0
      %816 = vmatpush2.msra.mxu0 0.0
      %817 = vmatprep.subr.mxu0 0.0
      %818 = vmatpush2.msra.mxu0 0.0
      %819 = vmatprep.mubr.f32.mxu0 0.0
      %820 = vmatmul.mubr.f32.gmra.mxu0 %v676
      %v821 = vpop.f32.mrf.mxu0
      %v822 = vadd.f32 0.0, %v821
      %v823 = vpop.f32.mrf.mxu0
      %824 = vdwg.mxu0
      %v825 = vadd.f32 %v656, %v751
      %v826 = vadd.f32 %v657, %v753
      %v827 = vadd.f32 %v658, %v822
      %v828 = vld [vmem:[%s165] sm:$0xff]
      %v829 = vld [vmem:[%s165 + $0x8] sm:$0xf]
      %s830 = scalar_lea.vmem %s1, 32
      %v831 = vld [vmem:[%s830] sm:$0xff]
      %v834 = vcombine.high %v828, %v828
      %835 = vrot.lane.b32.xlu0 %v828, 109
      %v836 = vpop.permute.xlu0 %835
      %837 = vrot.lane.b32.xlu0 %v834, 109
      %v838 = vpop.permute.xlu0 %837
      %839 = vrot.lane.b32.xlu0 %v829, 109
      %v840 = vpop.permute.xlu0 %839
      %vm841 = vcmask 891904
      %v842 = vsel %vm841, %v836, %v838
      %v843 = vsel %vm841, %v838, %v840
      %v845 = vsel %vm188, %v831, 0
      %v847 = vsel %vm192, %v842, 0
      %v849 = vsel %vm192, %v843, 0
      %v851 = vsel %vm192, %v840, 0
      %853 = vmatprep.subr.mxu0 0.0
      %854 = vmatpush1.msra.mxu0 0.0
      %855 = vmatprep.subr.mxu0 0.0
      %856 = vmatpush1.msra.mxu0 0.0
      %857 = vmatprep.subr.mxu0 0.0
      %858 = vmatpush1.msra.mxu0 0.0
      %859 = vmatprep.subr.mxu0 0.0
      %860 = vmatpush1.msra.mxu0 0.0
      %861 = vmatprep.subr.mxu0 0.0
      %862 = vmatpush1.msra.mxu0 0.0
      %863 = vmatprep.subr.mxu0 0.0
      %864 = vmatpush1.msra.mxu0 0.0
      %865 = vmatprep.subr.mxu0 0.0
      %866 = vmatpush1.msra.mxu0 0.0
      %867 = vmatprep.subr.mxu0 0.0
      %868 = vmatpush1.msra.mxu0 0.0
      %869 = vmatprep.subr.mxu0 0.0
      %870 = vmatpush1.msra.mxu0 0.0
      %871 = vmatprep.subr.mxu0 0.0
      %872 = vmatpush1.msra.mxu0 0.0
      %873 = vmatprep.subr.mxu0 0.0
      %874 = vmatpush1.msra.mxu0 0.0
      %875 = vmatprep.subr.mxu0 0.0
      %876 = vmatpush1.msra.mxu0 0.0
      %877 = vmatprep.subr.mxu0 0.0
      %878 = vmatpush1.msra.mxu0 0.0
      %879 = vmatprep.subr.mxu0 0.0
      %880 = vmatpush1.msra.mxu0 0.0
      %881 = vmatprep.subr.mxu0 0.0
      %882 = vmatpush1.msra.mxu0 0.0
      %883 = vmatprep.subr.mxu0 %v849
      %884 = vmatpush1.msra.mxu0 %v847
      %885 = vmatprep.subr.mxu0 0.0
      %886 = vmatpush2.msra.mxu0 0.0
      %887 = vmatprep.subr.mxu0 0.0
      %888 = vmatpush2.msra.mxu0 0.0
      %889 = vmatprep.subr.mxu0 0.0
      %890 = vmatpush2.msra.mxu0 0.0
      %891 = vmatprep.subr.mxu0 0.0
      %892 = vmatpush2.msra.mxu0 0.0
      %893 = vmatprep.subr.mxu0 0.0
      %894 = vmatpush2.msra.mxu0 0.0
      %895 = vmatprep.subr.mxu0 0.0
      %896 = vmatpush2.msra.mxu0 0.0
      %897 = vmatprep.subr.mxu0 0.0
      %898 = vmatpush2.msra.mxu0 0.0
      %899 = vmatprep.subr.mxu0 0.0
      %900 = vmatpush2.msra.mxu0 0.0
      %901 = vmatprep.subr.mxu0 0.0
      %902 = vmatpush2.msra.mxu0 0.0
      %903 = vmatprep.subr.mxu0 0.0
      %904 = vmatpush2.msra.mxu0 0.0
      %905 = vmatprep.subr.mxu0 0.0
      %906 = vmatpush2.msra.mxu0 0.0
      %907 = vmatprep.subr.mxu0 0.0
      %908 = vmatpush2.msra.mxu0 0.0
      %909 = vmatprep.subr.mxu0 0.0
      %910 = vmatpush2.msra.mxu0 0.0
      %911 = vmatprep.subr.mxu0 0.0
      %912 = vmatpush2.msra.mxu0 0.0
      %913 = vmatprep.subr.mxu0 0.0
      %914 = vmatpush2.msra.mxu0 0.0
      %915 = vmatprep.subr.mxu0 0.0
      %916 = vmatpush2.msra.mxu0 0.0
      %917 = vmatprep.mubr.f32.mxu0 0.0
      %918 = vmatmul.mubr.f32.gmra.mxu0 %v845
      %v919 = vpop.f32.mrf.mxu0
      %v920 = vadd.f32 0.0, %v919
      %v921 = vpop.f32.mrf.mxu0
      %v922 = vadd.f32 0.0, %v921
      %923 = vdwg.mxu0
      %924 = vmatprep.subr.mxu0 0.0
      %925 = vmatpush1.msra.mxu0 0.0
      %926 = vmatprep.subr.mxu0 0.0
      %927 = vmatpush1.msra.mxu0 0.0
      %928 = vmatprep.subr.mxu0 0.0
      %929 = vmatpush1.msra.mxu0 0.0
      %930 = vmatprep.subr.mxu0 0.0
      %931 = vmatpush1.msra.mxu0 0.0
      %932 = vmatprep.subr.mxu0 0.0
      %933 = vmatpush1.msra.mxu0 0.0
      %934 = vmatprep.subr.mxu0 0.0
      %935 = vmatpush1.msra.mxu0 0.0
      %936 = vmatprep.subr.mxu0 0.0
      %937 = vmatpush1.msra.mxu0 0.0
      %938 = vmatprep.subr.mxu0 0.0
      %939 = vmatpush1.msra.mxu0 0.0
      %940 = vmatprep.subr.mxu0 0.0
      %941 = vmatpush1.msra.mxu0 0.0
      %942 = vmatprep.subr.mxu0 0.0
      %943 = vmatpush1.msra.mxu0 0.0
      %944 = vmatprep.subr.mxu0 0.0
      %945 = vmatpush1.msra.mxu0 0.0
      %946 = vmatprep.subr.mxu0 0.0
      %947 = vmatpush1.msra.mxu0 0.0
      %948 = vmatprep.subr.mxu0 0.0
      %949 = vmatpush1.msra.mxu0 0.0
      %950 = vmatprep.subr.mxu0 0.0
      %951 = vmatpush1.msra.mxu0 0.0
      %952 = vmatprep.subr.mxu0 0.0
      %953 = vmatpush1.msra.mxu0 0.0
      %954 = vmatprep.subr.mxu0 0.0
      %955 = vmatpush1.msra.mxu0 %v851
      %956 = vmatprep.subr.mxu0 0.0
      %957 = vmatpush2.msra.mxu0 0.0
      %958 = vmatprep.subr.mxu0 0.0
      %959 = vmatpush2.msra.mxu0 0.0
      %960 = vmatprep.subr.mxu0 0.0
      %961 = vmatpush2.msra.mxu0 0.0
      %962 = vmatprep.subr.mxu0 0.0
      %963 = vmatpush2.msra.mxu0 0.0
      %964 = vmatprep.subr.mxu0 0.0
      %965 = vmatpush2.msra.mxu0 0.0
      %966 = vmatprep.subr.mxu0 0.0
      %967 = vmatpush2.msra.mxu0 0.0
      %968 = vmatprep.subr.mxu0 0.0
      %969 = vmatpush2.msra.mxu0 0.0
      %970 = vmatprep.subr.mxu0 0.0
      %971 = vmatpush2.msra.mxu0 0.0
      %972 = vmatprep.subr.mxu0 0.0
      %973 = vmatpush2.msra.mxu0 0.0
      %974 = vmatprep.subr.mxu0 0.0
      %975 = vmatpush2.msra.mxu0 0.0
      %976 = vmatprep.subr.mxu0 0.0
      %977 = vmatpush2.msra.mxu0 0.0
      %978 = vmatprep.subr.mxu0 0.0
      %979 = vmatpush2.msra.mxu0 0.0
      %980 = vmatprep.subr.mxu0 0.0
      %981 = vmatpush2.msra.mxu0 0.0
      %982 = vmatprep.subr.mxu0 0.0
      %983 = vmatpush2.msra.mxu0 0.0
      %984 = vmatprep.subr.mxu0 0.0
      %985 = vmatpush2.msra.mxu0 0.0
      %986 = vmatprep.subr.mxu0 0.0
      %987 = vmatpush2.msra.mxu0 0.0
      %988 = vmatprep.mubr.f32.mxu0 0.0
      %989 = vmatmul.mubr.f32.gmra.mxu0 %v845
      %v990 = vpop.f32.mrf.mxu0
      %v991 = vadd.f32 0.0, %v990
      %v992 = vpop.f32.mrf.mxu0
      %993 = vdwg.mxu0
      %v994 = vadd.f32 %v825, %v920
      %v995 = vadd.f32 %v826, %v922
      %v996 = vadd.f32 %v827, %v991
      %v997 = vld [vmem:[%s165] sm:$0xff]
      %v998 = vld [vmem:[%s165 + $0x8] sm:$0xf]
      %s999 = scalar_lea.vmem %s1, 40
      %v1000 = vld [vmem:[%s999] sm:$0xff]
      %v1003 = vcombine.high %v997, %v997
      %1004 = vrot.lane.b32.xlu0 %v997, 108
      %v1005 = vpop.permute.xlu0 %1004
      %1006 = vrot.lane.b32.xlu0 %v1003, 108
      %v1007 = vpop.permute.xlu0 %1006
      %1008 = vrot.lane.b32.xlu0 %v998, 108
      %v1009 = vpop.permute.xlu0 %1008
      %vm1010 = vcmask 883712
      %v1011 = vsel %vm1010, %v1005, %v1007
      %v1012 = vsel %vm1010, %v1007, %v1009
      %v1014 = vsel %vm188, %v1000, 0
      %v1016 = vsel %vm192, %v1011, 0
      %v1018 = vsel %vm192, %v1012, 0
      %v1020 = vsel %vm192, %v1009, 0
      %1022 = vmatprep.subr.mxu0 0.0
      %1023 = vmatpush1.msra.mxu0 0.0
      %1024 = vmatprep.subr.mxu0 0.0
      %1025 = vmatpush1.msra.mxu0 0.0
      %1026 = vmatprep.subr.mxu0 0.0
      %1027 = vmatpush1.msra.mxu0 0.0
      %1028 = vmatprep.subr.mxu0 0.0
      %1029 = vmatpush1.msra.mxu0 0.0
      %1030 = vmatprep.subr.mxu0 0.0
      %1031 = vmatpush1.msra.mxu0 0.0
      %1032 = vmatprep.subr.mxu0 0.0
      %1033 = vmatpush1.msra.mxu0 0.0
      %1034 = vmatprep.subr.mxu0 0.0
      %1035 = vmatpush1.msra.mxu0 0.0
      %1036 = vmatprep.subr.mxu0 0.0
      %1037 = vmatpush1.msra.mxu0 0.0
      %1038 = vmatprep.subr.mxu0 0.0
      %1039 = vmatpush1.msra.mxu0 0.0
      %1040 = vmatprep.subr.mxu0 0.0
      %1041 = vmatpush1.msra.mxu0 0.0
      %1042 = vmatprep.subr.mxu0 0.0
      %1043 = vmatpush1.msra.mxu0 0.0
      %1044 = vmatprep.subr.mxu0 0.0
      %1045 = vmatpush1.msra.mxu0 0.0
      %1046 = vmatprep.subr.mxu0 0.0
      %1047 = vmatpush1.msra.mxu0 0.0
      %1048 = vmatprep.subr.mxu0 0.0
      %1049 = vmatpush1.msra.mxu0 0.0
      %1050 = vmatprep.subr.mxu0 0.0
      %1051 = vmatpush1.msra.mxu0 0.0
      %1052 = vmatprep.subr.mxu0 %v1018
      %1053 = vmatpush1.msra.mxu0 %v1016
      %1054 = vmatprep.subr.mxu0 0.0
      %1055 = vmatpush2.msra.mxu0 0.0
      %1056 = vmatprep.subr.mxu0 0.0
      %1057 = vmatpush2.msra.mxu0 0.0
      %1058 = vmatprep.subr.mxu0 0.0
      %1059 = vmatpush2.msra.mxu0 0.0
      %1060 = vmatprep.subr.mxu0 0.0
      %1061 = vmatpush2.msra.mxu0 0.0
      %1062 = vmatprep.subr.mxu0 0.0
      %1063 = vmatpush2.msra.mxu0 0.0
      %1064 = vmatprep.subr.mxu0 0.0
      %1065 = vmatpush2.msra.mxu0 0.0
      %1066 = vmatprep.subr.mxu0 0.0
      %1067 = vmatpush2.msra.mxu0 0.0
      %1068 = vmatprep.subr.mxu0 0.0
      %1069 = vmatpush2.msra.mxu0 0.0
      %1070 = vmatprep.subr.mxu0 0.0
      %1071 = vmatpush2.msra.mxu0 0.0
      %1072 = vmatprep.subr.mxu0 0.0
      %1073 = vmatpush2.msra.mxu0 0.0
      %1074 = vmatprep.subr.mxu0 0.0
      %1075 = vmatpush2.msra.mxu0 0.0
      %1076 = vmatprep.subr.mxu0 0.0
      %1077 = vmatpush2.msra.mxu0 0.0
      %1078 = vmatprep.subr.mxu0 0.0
      %1079 = vmatpush2.msra.mxu0 0.0
      %1080 = vmatprep.subr.mxu0 0.0
      %1081 = vmatpush2.msra.mxu0 0.0
      %1082 = vmatprep.subr.mxu0 0.0
      %1083 = vmatpush2.msra.mxu0 0.0
      %1084 = vmatprep.subr.mxu0 0.0
      %1085 = vmatpush2.msra.mxu0 0.0
      %1086 = vmatprep.mubr.f32.mxu0 0.0
      %1087 = vmatmul.mubr.f32.gmra.mxu0 %v1014
      %v1088 = vpop.f32.mrf.mxu0
      %v1089 = vadd.f32 0.0, %v1088
      %v1090 = vpop.f32.mrf.mxu0
      %v1091 = vadd.f32 0.0, %v1090
      %1092 = vdwg.mxu0
      %1093 = vmatprep.subr.mxu0 0.0
      %1094 = vmatpush1.msra.mxu0 0.0
      %1095 = vmatprep.subr.mxu0 0.0
      %1096 = vmatpush1.msra.mxu0 0.0
      %1097 = vmatprep.subr.mxu0 0.0
      %1098 = vmatpush1.msra.mxu0 0.0
      %1099 = vmatprep.subr.mxu0 0.0
      %1100 = vmatpush1.msra.mxu0 0.0
      %1101 = vmatprep.subr.mxu0 0.0
      %1102 = vmatpush1.msra.mxu0 0.0
      %1103 = vmatprep.subr.mxu0 0.0
      %1104 = vmatpush1.msra.mxu0 0.0
      %1105 = vmatprep.subr.mxu0 0.0
      %1106 = vmatpush1.msra.mxu0 0.0
      %1107 = vmatprep.subr.mxu0 0.0
      %1108 = vmatpush1.msra.mxu0 0.0
      %1109 = vmatprep.subr.mxu0 0.0
      %1110 = vmatpush1.msra.mxu0 0.0
      %1111 = vmatprep.subr.mxu0 0.0
      %1112 = vmatpush1.msra.mxu0 0.0
      %1113 = vmatprep.subr.mxu0 0.0
      %1114 = vmatpush1.msra.mxu0 0.0
      %1115 = vmatprep.subr.mxu0 0.0
      %1116 = vmatpush1.msra.mxu0 0.0
      %1117 = vmatprep.subr.mxu0 0.0
      %1118 = vmatpush1.msra.mxu0 0.0
      %1119 = vmatprep.subr.mxu0 0.0
      %1120 = vmatpush1.msra.mxu0 0.0
      %1121 = vmatprep.subr.mxu0 0.0
      %1122 = vmatpush1.msra.mxu0 0.0
      %1123 = vmatprep.subr.mxu0 0.0
      %1124 = vmatpush1.msra.mxu0 %v1020
      %1125 = vmatprep.subr.mxu0 0.0
      %1126 = vmatpush2.msra.mxu0 0.0
      %1127 = vmatprep.subr.mxu0 0.0
      %1128 = vmatpush2.msra.mxu0 0.0
      %1129 = vmatprep.subr.mxu0 0.0
      %1130 = vmatpush2.msra.mxu0 0.0
      %1131 = vmatprep.subr.mxu0 0.0
      %1132 = vmatpush2.msra.mxu0 0.0
      %1133 = vmatprep.subr.mxu0 0.0
      %1134 = vmatpush2.msra.mxu0 0.0
      %1135 = vmatprep.subr.mxu0 0.0
      %1136 = vmatpush2.msra.mxu0 0.0
      %1137 = vmatprep.subr.mxu0 0.0
      %1138 = vmatpush2.msra.mxu0 0.0
      %1139 = vmatprep.subr.mxu0 0.0
      %1140 = vmatpush2.msra.mxu0 0.0
      %1141 = vmatprep.subr.mxu0 0.0
      %1142 = vmatpush2.msra.mxu0 0.0
      %1143 = vmatprep.subr.mxu0 0.0
      %1144 = vmatpush2.msra.mxu0 0.0
      %1145 = vmatprep.subr.mxu0 0.0
      %1146 = vmatpush2.msra.mxu0 0.0
      %1147 = vmatprep.subr.mxu0 0.0
      %1148 = vmatpush2.msra.mxu0 0.0
      %1149 = vmatprep.subr.mxu0 0.0
      %1150 = vmatpush2.msra.mxu0 0.0
      %1151 = vmatprep.subr.mxu0 0.0
      %1152 = vmatpush2.msra.mxu0 0.0
      %1153 = vmatprep.subr.mxu0 0.0
      %1154 = vmatpush2.msra.mxu0 0.0
      %1155 = vmatprep.subr.mxu0 0.0
      %1156 = vmatpush2.msra.mxu0 0.0
      %1157 = vmatprep.mubr.f32.mxu0 0.0
      %1158 = vmatmul.mubr.f32.gmra.mxu0 %v1014
      %v1159 = vpop.f32.mrf.mxu0
      %v1160 = vadd.f32 0.0, %v1159
      %v1161 = vpop.f32.mrf.mxu0
      %1162 = vdwg.mxu0
      %v1163 = vadd.f32 %v994, %v1089
      %v1164 = vadd.f32 %v995, %v1091
      %v1165 = vadd.f32 %v996, %v1160
      %v1166 = vld [vmem:[%s165] sm:$0xff]
      %v1167 = vld [vmem:[%s165 + $0x8] sm:$0xf]
      %s1168 = scalar_lea.vmem %s1, 48
      %v1169 = vld [vmem:[%s1168] sm:$0xff]
      %v1172 = vcombine.high %v1166, %v1166
      %1173 = vrot.lane.b32.xlu0 %v1166, 92
      %v1174 = vpop.permute.xlu0 %1173
      %1175 = vrot.lane.b32.xlu0 %v1172, 92
      %v1176 = vpop.permute.xlu0 %1175
      %1177 = vrot.lane.b32.xlu0 %v1167, 92
      %v1178 = vpop.permute.xlu0 %1177
      %vm1179 = vcmask 752640
      %v1180 = vsel %vm1179, %v1174, %v1176
      %v1181 = vsel %vm1179, %v1176, %v1178
      %v1183 = vsel %vm188, %v1169, 0
      %v1185 = vsel %vm192, %v1180, 0
      %v1187 = vsel %vm192, %v1181, 0
      %v1189 = vsel %vm192, %v1178, 0
      %1191 = vmatprep.subr.mxu0 0.0
      %1192 = vmatpush1.msra.mxu0 0.0
      %1193 = vmatprep.subr.mxu0 0.0
      %1194 = vmatpush1.msra.mxu0 0.0
      %1195 = vmatprep.subr.mxu0 0.0
      %1196 = vmatpush1.msra.mxu0 0.0
      %1197 = vmatprep.subr.mxu0 0.0
      %1198 = vmatpush1.msra.mxu0 0.0
      %1199 = vmatprep.subr.mxu0 0.0
      %1200 = vmatpush1.msra.mxu0 0.0
      %1201 = vmatprep.subr.mxu0 0.0
      %1202 = vmatpush1.msra.mxu0 0.0
      %1203 = vmatprep.subr.mxu0 0.0
      %1204 = vmatpush1.msra.mxu0 0.0
      %1205 = vmatprep.subr.mxu0 0.0
      %1206 = vmatpush1.msra.mxu0 0.0
      %1207 = vmatprep.subr.mxu0 0.0
      %1208 = vmatpush1.msra.mxu0 0.0
      %1209 = vmatprep.subr.mxu0 0.0
      %1210 = vmatpush1.msra.mxu0 0.0
      %1211 = vmatprep.subr.mxu0 0.0
      %1212 = vmatpush1.msra.mxu0 0.0
      %1213 = vmatprep.subr.mxu0 0.0
      %1214 = vmatpush1.msra.mxu0 0.0
      %1215 = vmatprep.subr.mxu0 0.0
      %1216 = vmatpush1.msra.mxu0 0.0
      %1217 = vmatprep.subr.mxu0 0.0
      %1218 = vmatpush1.msra.mxu0 0.0
      %1219 = vmatprep.subr.mxu0 0.0
      %1220 = vmatpush1.msra.mxu0 0.0
      %1221 = vmatprep.subr.mxu0 %v1187
      %1222 = vmatpush1.msra.mxu0 %v1185
      %1223 = vmatprep.subr.mxu0 0.0
      %1224 = vmatpush2.msra.mxu0 0.0
      %1225 = vmatprep.subr.mxu0 0.0
      %1226 = vmatpush2.msra.mxu0 0.0
      %1227 = vmatprep.subr.mxu0 0.0
      %1228 = vmatpush2.msra.mxu0 0.0
      %1229 = vmatprep.subr.mxu0 0.0
      %1230 = vmatpush2.msra.mxu0 0.0
      %1231 = vmatprep.subr.mxu0 0.0
      %1232 = vmatpush2.msra.mxu0 0.0
      %1233 = vmatprep.subr.mxu0 0.0
      %1234 = vmatpush2.msra.mxu0 0.0
      %1235 = vmatprep.subr.mxu0 0.0
      %1236 = vmatpush2.msra.mxu0 0.0
      %1237 = vmatprep.subr.mxu0 0.0
      %1238 = vmatpush2.msra.mxu0 0.0
      %1239 = vmatprep.subr.mxu0 0.0
      %1240 = vmatpush2.msra.mxu0 0.0
      %1241 = vmatprep.subr.mxu0 0.0
      %1242 = vmatpush2.msra.mxu0 0.0
      %1243 = vmatprep.subr.mxu0 0.0
      %1244 = vmatpush2.msra.mxu0 0.0
      %1245 = vmatprep.subr.mxu0 0.0
      %1246 = vmatpush2.msra.mxu0 0.0
      %1247 = vmatprep.subr.mxu0 0.0
      %1248 = vmatpush2.msra.mxu0 0.0
      %1249 = vmatprep.subr.mxu0 0.0
      %1250 = vmatpush2.msra.mxu0 0.0
      %1251 = vmatprep.subr.mxu0 0.0
      %1252 = vmatpush2.msra.mxu0 0.0
      %1253 = vmatprep.subr.mxu0 0.0
      %1254 = vmatpush2.msra.mxu0 0.0
      %1255 = vmatprep.mubr.f32.mxu0 0.0
      %1256 = vmatmul.mubr.f32.gmra.mxu0 %v1183
      %v1257 = vpop.f32.mrf.mxu0
      %v1258 = vadd.f32 0.0, %v1257
      %v1259 = vpop.f32.mrf.mxu0
      %v1260 = vadd.f32 0.0, %v1259
      %1261 = vdwg.mxu0
      %1262 = vmatprep.subr.mxu0 0.0
      %1263 = vmatpush1.msra.mxu0 0.0
      %1264 = vmatprep.subr.mxu0 0.0
      %1265 = vmatpush1.msra.mxu0 0.0
      %1266 = vmatprep.subr.mxu0 0.0
      %1267 = vmatpush1.msra.mxu0 0.0
      %1268 = vmatprep.subr.mxu0 0.0
      %1269 = vmatpush1.msra.mxu0 0.0
      %1270 = vmatprep.subr.mxu0 0.0
      %1271 = vmatpush1.msra.mxu0 0.0
      %1272 = vmatprep.subr.mxu0 0.0
      %1273 = vmatpush1.msra.mxu0 0.0
      %1274 = vmatprep.subr.mxu0 0.0
      %1275 = vmatpush1.msra.mxu0 0.0
      %1276 = vmatprep.subr.mxu0 0.0
      %1277 = vmatpush1.msra.mxu0 0.0
      %1278 = vmatprep.subr.mxu0 0.0
      %1279 = vmatpush1.msra.mxu0 0.0
      %1280 = vmatprep.subr.mxu0 0.0
      %1281 = vmatpush1.msra.mxu0 0.0
      %1282 = vmatprep.subr.mxu0 0.0
      %1283 = vmatpush1.msra.mxu0 0.0
      %1284 = vmatprep.subr.mxu0 0.0
      %1285 = vmatpush1.msra.mxu0 0.0
      %1286 = vmatprep.subr.mxu0 0.0
      %1287 = vmatpush1.msra.mxu0 0.0
      %1288 = vmatprep.subr.mxu0 0.0
      %1289 = vmatpush1.msra.mxu0 0.0
      %1290 = vmatprep.subr.mxu0 0.0
      %1291 = vmatpush1.msra.mxu0 0.0
      %1292 = vmatprep.subr.mxu0 0.0
      %1293 = vmatpush1.msra.mxu0 %v1189
      %1294 = vmatprep.subr.mxu0 0.0
      %1295 = vmatpush2.msra.mxu0 0.0
      %1296 = vmatprep.subr.mxu0 0.0
      %1297 = vmatpush2.msra.mxu0 0.0
      %1298 = vmatprep.subr.mxu0 0.0
      %1299 = vmatpush2.msra.mxu0 0.0
      %1300 = vmatprep.subr.mxu0 0.0
      %1301 = vmatpush2.msra.mxu0 0.0
      %1302 = vmatprep.subr.mxu0 0.0
      %1303 = vmatpush2.msra.mxu0 0.0
      %1304 = vmatprep.subr.mxu0 0.0
      %1305 = vmatpush2.msra.mxu0 0.0
      %1306 = vmatprep.subr.mxu0 0.0
      %1307 = vmatpush2.msra.mxu0 0.0
      %1308 = vmatprep.subr.mxu0 0.0
      %1309 = vmatpush2.msra.mxu0 0.0
      %1310 = vmatprep.subr.mxu0 0.0
      %1311 = vmatpush2.msra.mxu0 0.0
      %1312 = vmatprep.subr.mxu0 0.0
      %1313 = vmatpush2.msra.mxu0 0.0
      %1314 = vmatprep.subr.mxu0 0.0
      %1315 = vmatpush2.msra.mxu0 0.0
      %1316 = vmatprep.subr.mxu0 0.0
      %1317 = vmatpush2.msra.mxu0 0.0
      %1318 = vmatprep.subr.mxu0 0.0
      %1319 = vmatpush2.msra.mxu0 0.0
      %1320 = vmatprep.subr.mxu0 0.0
      %1321 = vmatpush2.msra.mxu0 0.0
      %1322 = vmatprep.subr.mxu0 0.0
      %1323 = vmatpush2.msra.mxu0 0.0
      %1324 = vmatprep.subr.mxu0 0.0
      %1325 = vmatpush2.msra.mxu0 0.0
      %1326 = vmatprep.mubr.f32.mxu0 0.0
      %1327 = vmatmul.mubr.f32.gmra.mxu0 %v1183
      %v1328 = vpop.f32.mrf.mxu0
      %v1329 = vadd.f32 0.0, %v1328
      %v1330 = vpop.f32.mrf.mxu0
      %1331 = vdwg.mxu0
      %v1332 = vadd.f32 %v1163, %v1258
      %v1333 = vadd.f32 %v1164, %v1260
      %v1334 = vadd.f32 %v1165, %v1329
      %v1335 = vld [vmem:[%s165] sm:$0xff]
      %v1336 = vld [vmem:[%s165 + $0x8] sm:$0xf]
      %s1337 = scalar_lea.vmem %s1, 56
      %v1338 = vld [vmem:[%s1337] sm:$0xff]
      %v1341 = vcombine.high %v1335, %v1335
      %1342 = vrot.lane.b32.xlu0 %v1335, 91
      %v1343 = vpop.permute.xlu0 %1342
      %1344 = vrot.lane.b32.xlu0 %v1341, 91
      %v1345 = vpop.permute.xlu0 %1344
      %1346 = vrot.lane.b32.xlu0 %v1336, 91
      %v1347 = vpop.permute.xlu0 %1346
      %vm1348 = vcmask 744448
      %v1349 = vsel %vm1348, %v1343, %v1345
      %v1350 = vsel %vm1348, %v1345, %v1347
      %v1352 = vsel %vm188, %v1338, 0
      %v1354 = vsel %vm192, %v1349, 0
      %v1356 = vsel %vm192, %v1350, 0
      %v1358 = vsel %vm192, %v1347, 0
      %1360 = vmatprep.subr.mxu0 0.0
      %1361 = vmatpush1.msra.mxu0 0.0
      %1362 = vmatprep.subr.mxu0 0.0
      %1363 = vmatpush1.msra.mxu0 0.0
      %1364 = vmatprep.subr.mxu0 0.0
      %1365 = vmatpush1.msra.mxu0 0.0
      %1366 = vmatprep.subr.mxu0 0.0
      %1367 = vmatpush1.msra.mxu0 0.0
      %1368 = vmatprep.subr.mxu0 0.0
      %1369 = vmatpush1.msra.mxu0 0.0
      %1370 = vmatprep.subr.mxu0 0.0
      %1371 = vmatpush1.msra.mxu0 0.0
      %1372 = vmatprep.subr.mxu0 0.0
      %1373 = vmatpush1.msra.mxu0 0.0
      %1374 = vmatprep.subr.mxu0 0.0
      %1375 = vmatpush1.msra.mxu0 0.0
      %1376 = vmatprep.subr.mxu0 0.0
      %1377 = vmatpush1.msra.mxu0 0.0
      %1378 = vmatprep.subr.mxu0 0.0
      %1379 = vmatpush1.msra.mxu0 0.0
      %1380 = vmatprep.subr.mxu0 0.0
      %1381 = vmatpush1.msra.mxu0 0.0
      %1382 = vmatprep.subr.mxu0 0.0
      %1383 = vmatpush1.msra.mxu0 0.0
      %1384 = vmatprep.subr.mxu0 0.0
      %1385 = vmatpush1.msra.mxu0 0.0
      %1386 = vmatprep.subr.mxu0 0.0
      %1387 = vmatpush1.msra.mxu0 0.0
      %1388 = vmatprep.subr.mxu0 0.0
      %1389 = vmatpush1.msra.mxu0 0.0
      %1390 = vmatprep.subr.mxu0 %v1356
      %1391 = vmatpush1.msra.mxu0 %v1354
      %1392 = vmatprep.subr.mxu0 0.0
      %1393 = vmatpush2.msra.mxu0 0.0
      %1394 = vmatprep.subr.mxu0 0.0
      %1395 = vmatpush2.msra.mxu0 0.0
      %1396 = vmatprep.subr.mxu0 0.0
      %1397 = vmatpush2.msra.mxu0 0.0
      %1398 = vmatprep.subr.mxu0 0.0
      %1399 = vmatpush2.msra.mxu0 0.0
      %1400 = vmatprep.subr.mxu0 0.0
      %1401 = vmatpush2.msra.mxu0 0.0
      %1402 = vmatprep.subr.mxu0 0.0
      %1403 = vmatpush2.msra.mxu0 0.0
      %1404 = vmatprep.subr.mxu0 0.0
      %1405 = vmatpush2.msra.mxu0 0.0
      %1406 = vmatprep.subr.mxu0 0.0
      %1407 = vmatpush2.msra.mxu0 0.0
      %1408 = vmatprep.subr.mxu0 0.0
      %1409 = vmatpush2.msra.mxu0 0.0
      %1410 = vmatprep.subr.mxu0 0.0
      %1411 = vmatpush2.msra.mxu0 0.0
      %1412 = vmatprep.subr.mxu0 0.0
      %1413 = vmatpush2.msra.mxu0 0.0
      %1414 = vmatprep.subr.mxu0 0.0
      %1415 = vmatpush2.msra.mxu0 0.0
      %1416 = vmatprep.subr.mxu0 0.0
      %1417 = vmatpush2.msra.mxu0 0.0
      %1418 = vmatprep.subr.mxu0 0.0
      %1419 = vmatpush2.msra.mxu0 0.0
      %1420 = vmatprep.subr.mxu0 0.0
      %1421 = vmatpush2.msra.mxu0 0.0
      %1422 = vmatprep.subr.mxu0 0.0
      %1423 = vmatpush2.msra.mxu0 0.0
      %1424 = vmatprep.mubr.f32.mxu0 0.0
      %1425 = vmatmul.mubr.f32.gmra.mxu0 %v1352
      %v1426 = vpop.f32.mrf.mxu0
      %v1427 = vadd.f32 0.0, %v1426
      %v1428 = vpop.f32.mrf.mxu0
      %v1429 = vadd.f32 0.0, %v1428
      %1430 = vdwg.mxu0
      %1431 = vmatprep.subr.mxu0 0.0
      %1432 = vmatpush1.msra.mxu0 0.0
      %1433 = vmatprep.subr.mxu0 0.0
      %1434 = vmatpush1.msra.mxu0 0.0
      %1435 = vmatprep.subr.mxu0 0.0
      %1436 = vmatpush1.msra.mxu0 0.0
      %1437 = vmatprep.subr.mxu0 0.0
      %1438 = vmatpush1.msra.mxu0 0.0
      %1439 = vmatprep.subr.mxu0 0.0
      %1440 = vmatpush1.msra.mxu0 0.0
      %1441 = vmatprep.subr.mxu0 0.0
      %1442 = vmatpush1.msra.mxu0 0.0
      %1443 = vmatprep.subr.mxu0 0.0
      %1444 = vmatpush1.msra.mxu0 0.0
      %1445 = vmatprep.subr.mxu0 0.0
      %1446 = vmatpush1.msra.mxu0 0.0
      %1447 = vmatprep.subr.mxu0 0.0
      %1448 = vmatpush1.msra.mxu0 0.0
      %1449 = vmatprep.subr.mxu0 0.0
      %1450 = vmatpush1.msra.mxu0 0.0
      %1451 = vmatprep.subr.mxu0 0.0
      %1452 = vmatpush1.msra.mxu0 0.0
      %1453 = vmatprep.subr.mxu0 0.0
      %1454 = vmatpush1.msra.mxu0 0.0
      %1455 = vmatprep.subr.mxu0 0.0
      %1456 = vmatpush1.msra.mxu0 0.0
      %1457 = vmatprep.subr.mxu0 0.0
      %1458 = vmatpush1.msra.mxu0 0.0
      %1459 = vmatprep.subr.mxu0 0.0
      %1460 = vmatpush1.msra.mxu0 0.0
      %1461 = vmatprep.subr.mxu0 0.0
      %1462 = vmatpush1.msra.mxu0 %v1358
      %1463 = vmatprep.subr.mxu0 0.0
      %1464 = vmatpush2.msra.mxu0 0.0
      %1465 = vmatprep.subr.mxu0 0.0
      %1466 = vmatpush2.msra.mxu0 0.0
      %1467 = vmatprep.subr.mxu0 0.0
      %1468 = vmatpush2.msra.mxu0 0.0
      %1469 = vmatprep.subr.mxu0 0.0
      %1470 = vmatpush2.msra.mxu0 0.0
      %1471 = vmatprep.subr.mxu0 0.0
      %1472 = vmatpush2.msra.mxu0 0.0
      %1473 = vmatprep.subr.mxu0 0.0
      %1474 = vmatpush2.msra.mxu0 0.0
      %1475 = vmatprep.subr.mxu0 0.0
      %1476 = vmatpush2.msra.mxu0 0.0
      %1477 = vmatprep.subr.mxu0 0.0
      %1478 = vmatpush2.msra.mxu0 0.0
      %1479 = vmatprep.subr.mxu0 0.0
      %1480 = vmatpush2.msra.mxu0 0.0
      %1481 = vmatprep.subr.mxu0 0.0
      %1482 = vmatpush2.msra.mxu0 0.0
      %1483 = vmatprep.subr.mxu0 0.0
      %1484 = vmatpush2.msra.mxu0 0.0
      %1485 = vmatprep.subr.mxu0 0.0
      %1486 = vmatpush2.msra.mxu0 0.0
      %1487 = vmatprep.subr.mxu0 0.0
      %1488 = vmatpush2.msra.mxu0 0.0
      %1489 = vmatprep.subr.mxu0 0.0
      %1490 = vmatpush2.msra.mxu0 0.0
      %1491 = vmatprep.subr.mxu0 0.0
      %1492 = vmatpush2.msra.mxu0 0.0
      %1493 = vmatprep.subr.mxu0 0.0
      %1494 = vmatpush2.msra.mxu0 0.0
      %1495 = vmatprep.mubr.f32.mxu0 0.0
      %1496 = vmatmul.mubr.f32.gmra.mxu0 %v1352
      %v1497 = vpop.f32.mrf.mxu0
      %v1498 = vadd.f32 0.0, %v1497
      %v1499 = vpop.f32.mrf.mxu0
      %1500 = vdwg.mxu0
      %v1501 = vadd.f32 %v1332, %v1427
      %v1502 = vadd.f32 %v1333, %v1429
      %v1503 = vadd.f32 %v1334, %v1498
      %v1504 = vld [vmem:[%s165] sm:$0xff]
      %v1505 = vld [vmem:[%s165 + $0x8] sm:$0xf]
      %s1506 = scalar_lea.vmem %s1, 64
      %v1507 = vld [vmem:[%s1506] sm:$0xff]
      %v1510 = vcombine.high %v1504, %v1504
      %1511 = vrot.lane.b32.xlu0 %v1504, 90
      %v1512 = vpop.permute.xlu0 %1511
      %1513 = vrot.lane.b32.xlu0 %v1510, 90
      %v1514 = vpop.permute.xlu0 %1513
      %1515 = vrot.lane.b32.xlu0 %v1505, 90
      %v1516 = vpop.permute.xlu0 %1515
      %vm1517 = vcmask 736256
      %v1518 = vsel %vm1517, %v1512, %v1514
      %v1519 = vsel %vm1517, %v1514, %v1516
      %v1521 = vsel %vm188, %v1507, 0
      %v1523 = vsel %vm192, %v1518, 0
      %v1525 = vsel %vm192, %v1519, 0
      %v1527 = vsel %vm192, %v1516, 0
      %1529 = vmatprep.subr.mxu0 0.0
      %1530 = vmatpush1.msra.mxu0 0.0
      %1531 = vmatprep.subr.mxu0 0.0
      %1532 = vmatpush1.msra.mxu0 0.0
      %1533 = vmatprep.subr.mxu0 0.0
      %1534 = vmatpush1.msra.mxu0 0.0
      %1535 = vmatprep.subr.mxu0 0.0
      %1536 = vmatpush1.msra.mxu0 0.0
      %1537 = vmatprep.subr.mxu0 0.0
      %1538 = vmatpush1.msra.mxu0 0.0
      %1539 = vmatprep.subr.mxu0 0.0
      %1540 = vmatpush1.msra.mxu0 0.0
      %1541 = vmatprep.subr.mxu0 0.0
      %1542 = vmatpush1.msra.mxu0 0.0
      %1543 = vmatprep.subr.mxu0 0.0
      %1544 = vmatpush1.msra.mxu0 0.0
      %1545 = vmatprep.subr.mxu0 0.0
      %1546 = vmatpush1.msra.mxu0 0.0
      %1547 = vmatprep.subr.mxu0 0.0
      %1548 = vmatpush1.msra.mxu0 0.0
      %1549 = vmatprep.subr.mxu0 0.0
      %1550 = vmatpush1.msra.mxu0 0.0
      %1551 = vmatprep.subr.mxu0 0.0
      %1552 = vmatpush1.msra.mxu0 0.0
      %1553 = vmatprep.subr.mxu0 0.0
      %1554 = vmatpush1.msra.mxu0 0.0
      %1555 = vmatprep.subr.mxu0 0.0
      %1556 = vmatpush1.msra.mxu0 0.0
      %1557 = vmatprep.subr.mxu0 0.0
      %1558 = vmatpush1.msra.mxu0 0.0
      %1559 = vmatprep.subr.mxu0 %v1525
      %1560 = vmatpush1.msra.mxu0 %v1523
      %1561 = vmatprep.subr.mxu0 0.0
      %1562 = vmatpush2.msra.mxu0 0.0
      %1563 = vmatprep.subr.mxu0 0.0
      %1564 = vmatpush2.msra.mxu0 0.0
      %1565 = vmatprep.subr.mxu0 0.0
      %1566 = vmatpush2.msra.mxu0 0.0
      %1567 = vmatprep.subr.mxu0 0.0
      %1568 = vmatpush2.msra.mxu0 0.0
      %1569 = vmatprep.subr.mxu0 0.0
      %1570 = vmatpush2.msra.mxu0 0.0
      %1571 = vmatprep.subr.mxu0 0.0
      %1572 = vmatpush2.msra.mxu0 0.0
      %1573 = vmatprep.subr.mxu0 0.0
      %1574 = vmatpush2.msra.mxu0 0.0
      %1575 = vmatprep.subr.mxu0 0.0
      %1576 = vmatpush2.msra.mxu0 0.0
      %1577 = vmatprep.subr.mxu0 0.0
      %1578 = vmatpush2.msra.mxu0 0.0
      %1579 = vmatprep.subr.mxu0 0.0
      %1580 = vmatpush2.msra.mxu0 0.0
      %1581 = vmatprep.subr.mxu0 0.0
      %1582 = vmatpush2.msra.mxu0 0.0
      %1583 = vmatprep.subr.mxu0 0.0
      %1584 = vmatpush2.msra.mxu0 0.0
      %1585 = vmatprep.subr.mxu0 0.0
      %1586 = vmatpush2.msra.mxu0 0.0
      %1587 = vmatprep.subr.mxu0 0.0
      %1588 = vmatpush2.msra.mxu0 0.0
      %1589 = vmatprep.subr.mxu0 0.0
      %1590 = vmatpush2.msra.mxu0 0.0
      %1591 = vmatprep.subr.mxu0 0.0
      %1592 = vmatpush2.msra.mxu0 0.0
      %1593 = vmatprep.mubr.f32.mxu0 0.0
      %1594 = vmatmul.mubr.f32.gmra.mxu0 %v1521
      %v1595 = vpop.f32.mrf.mxu0
      %v1596 = vadd.f32 0.0, %v1595
      %v1597 = vpop.f32.mrf.mxu0
      %v1598 = vadd.f32 0.0, %v1597
      %1599 = vdwg.mxu0
      %1600 = vmatprep.subr.mxu0 0.0
      %1601 = vmatpush1.msra.mxu0 0.0
      %1602 = vmatprep.subr.mxu0 0.0
      %1603 = vmatpush1.msra.mxu0 0.0
      %1604 = vmatprep.subr.mxu0 0.0
      %1605 = vmatpush1.msra.mxu0 0.0
      %1606 = vmatprep.subr.mxu0 0.0
      %1607 = vmatpush1.msra.mxu0 0.0
      %1608 = vmatprep.subr.mxu0 0.0
      %1609 = vmatpush1.msra.mxu0 0.0
      %1610 = vmatprep.subr.mxu0 0.0
      %1611 = vmatpush1.msra.mxu0 0.0
      %1612 = vmatprep.subr.mxu0 0.0
      %1613 = vmatpush1.msra.mxu0 0.0
      %1614 = vmatprep.subr.mxu0 0.0
      %1615 = vmatpush1.msra.mxu0 0.0
      %1616 = vmatprep.subr.mxu0 0.0
      %1617 = vmatpush1.msra.mxu0 0.0
      %1618 = vmatprep.subr.mxu0 0.0
      %1619 = vmatpush1.msra.mxu0 0.0
      %1620 = vmatprep.subr.mxu0 0.0
      %1621 = vmatpush1.msra.mxu0 0.0
      %1622 = vmatprep.subr.mxu0 0.0
      %1623 = vmatpush1.msra.mxu0 0.0
      %1624 = vmatprep.subr.mxu0 0.0
      %1625 = vmatpush1.msra.mxu0 0.0
      %1626 = vmatprep.subr.mxu0 0.0
      %1627 = vmatpush1.msra.mxu0 0.0
      %1628 = vmatprep.subr.mxu0 0.0
      %1629 = vmatpush1.msra.mxu0 0.0
      %1630 = vmatprep.subr.mxu0 0.0
      %1631 = vmatpush1.msra.mxu0 %v1527
      %1632 = vmatprep.subr.mxu0 0.0
      %1633 = vmatpush2.msra.mxu0 0.0
      %1634 = vmatprep.subr.mxu0 0.0
      %1635 = vmatpush2.msra.mxu0 0.0
      %1636 = vmatprep.subr.mxu0 0.0
      %1637 = vmatpush2.msra.mxu0 0.0
      %1638 = vmatprep.subr.mxu0 0.0
      %1639 = vmatpush2.msra.mxu0 0.0
      %1640 = vmatprep.subr.mxu0 0.0
      %1641 = vmatpush2.msra.mxu0 0.0
      %1642 = vmatprep.subr.mxu0 0.0
      %1643 = vmatpush2.msra.mxu0 0.0
      %1644 = vmatprep.subr.mxu0 0.0
      %1645 = vmatpush2.msra.mxu0 0.0
      %1646 = vmatprep.subr.mxu0 0.0
      %1647 = vmatpush2.msra.mxu0 0.0
      %1648 = vmatprep.subr.mxu0 0.0
      %1649 = vmatpush2.msra.mxu0 0.0
      %1650 = vmatprep.subr.mxu0 0.0
      %1651 = vmatpush2.msra.mxu0 0.0
      %1652 = vmatprep.subr.mxu0 0.0
      %1653 = vmatpush2.msra.mxu0 0.0
      %1654 = vmatprep.subr.mxu0 0.0
      %1655 = vmatpush2.msra.mxu0 0.0
      %1656 = vmatprep.subr.mxu0 0.0
      %1657 = vmatpush2.msra.mxu0 0.0
      %1658 = vmatprep.subr.mxu0 0.0
      %1659 = vmatpush2.msra.mxu0 0.0
      %1660 = vmatprep.subr.mxu0 0.0
      %1661 = vmatpush2.msra.mxu0 0.0
      %1662 = vmatprep.subr.mxu0 0.0
      %1663 = vmatpush2.msra.mxu0 0.0
      %1664 = vmatprep.mubr.f32.mxu0 0.0
      %1665 = vmatmul.mubr.f32.gmra.mxu0 %v1521
      %v1666 = vpop.f32.mrf.mxu0
      %v1667 = vadd.f32 0.0, %v1666
      %v1668 = vpop.f32.mrf.mxu0
      %1669 = vdwg.mxu0
      %v1670 = vadd.f32 %v1501, %v1596
      %v1671 = vadd.f32 %v1502, %v1598
      %v1672 = vadd.f32 %v1503, %v1667
      %v1673 = vld [vmem:[%s2] sm:$0xff]
      %1675 = vset.pattern.permute.xlu0 0
      %1676 = vperm.xlu0 %1675, %v1673
      %v1677 = vpop.permute.xlu0 %1676
      %v1679 = vadd.f32 %v1670, %v1677
      %v1680 = vadd.f32 %v1671, %v1677
      %v1681 = vadd.f32 %v1672, %v1677
      %1682 = vst [vmem:[%s170] sm:$0xff] %v1679
      %1683 = vst [vmem:[%s170 + $0x8] sm:$0xff] %v1680
      %vm1684 = vcmask 261120
      %1685 = vst.msk [vmem:[%s170 + $0x10] sm:$0xff] %vm1684, %v1681
      %p1686 = scmp.lt.s32.totalorder %s14, 1
      %s1687 = scalar_select %p1686, %s14, 1
      %s1688 = smul.addr %s1687, 3
      %s1689 = smul.addr %s1688, 8
      %s1690 = scalar_lea.vmem %s3, %s1689
      // Predicated region
      $region33: #{forward.1} parent=31 // pred_check
        %p1691 = pneg %p100
      $region34: #{forward.1} parent=31 // pred_check_branch
        %1693 = sbr.rel (%p1691) target = $region36
      $region35: #{forward.1} parent=31 // pred_region
        _
      $region36: #{forward.1} parent=31 // pred_fallthru
        _
    $region32: #{forward.1} parent=5 // pred_fallthru
      _
    %p1694 = scmp.le.s32.totalorder 2, %s9
    // Predicated region
    $region37: #{forward.1} parent=5 // pred_check
      %p1695 = pneg %p1694
    $region38: #{forward.1} parent=5 // pred_check_branch
      %1697 = sbr.rel (%p1695) target = $region40
    $region39: #{forward.1} parent=5 // pred_region
      %s1698 = ssub.s32 %s9, 2
      // Predicated region
      $region41: #{forward.1} parent=39 // pred_check
        %p1699 = pneg %p106
      $region42: #{forward.1} parent=39 // pred_check_branch
        %1701 = sbr.rel (%p1699) target = $region44
      $region43: #{forward.1} parent=39 // pred_region
        %p1702 = scmp.lt.s32.totalorder %s15, 1
        %s1703 = scalar_select %p1702, %s15, 1
        %s1704 = smul.addr %s1703, 3
        %s1705 = smul.addr %s1704, 8
        %s1706 = scalar_lea.vmem %s3, %s1705
      $region44: #{forward.1} parent=39 // pred_fallthru
        _
    $region40: #{forward.1} parent=5 // pred_fallthru
      _
  $region6: #{forward.1} parent=0 // loop_footer
    %s13 = sadd.s32 1, %s9
  $region7: #{forward.1} parent=0 // loop_footer_branch
    %8 = sbr.rel target = $region3
  $region8: #{forward.1} parent=0 // loop_exit
    _

</llo_original>
